<compile_context>
chip_gen: v6e
topology: v6e:2x2x1
jax: 0.10.0
libtpu: 0.0.40
codegen_flags: <defaults>
</compile_context>

<pallas_src>
import functools

import jax
import jax.numpy as jnp
from jax import lax
from jax.experimental import pallas as pl
from jax.experimental.pallas import tpu as pltpu

DILATIONS = (1, 2, 4, 8)
EPS = 1e-5


def _dil_conv_kernel(x_ref, att_ref, ln_ref, w_ref, bias_ref, o_ref,
                     xn_ref, acc_ref, *, dilations, seq_len, eps):
    # Per grid step (b = batch block, branch = pl.program_id(1)):
    #   x_ref   : (B_TILE, L_pad, C)   caller dtype
    #   att_ref : (B_TILE, L_pad, nb)  f32
    #   ln_ref  : (4, C) f32  rows = [gamma1, beta1, gamma2, beta2]
    #   w_ref   : (1, 2C, C) bf16  -- merged [W_prev ; -W_next] of this branch
    #   bias_ref: (nb, C) f32
    #   o_ref   : (B_TILE, L_pad, C)
    #   xn_ref  : (B_TILE, L_pad, C) f32 scratch (LN1 output, persists per block)
    #   acc_ref : (B_TILE*L_pad, C)  f32 scratch (branch accumulator)
    bt, lp, C = x_ref.shape
    nb = len(dilations)
    M = bt * lp
    branch = pl.program_id(1)

    g1 = ln_ref[0:1, :]
    b1 = ln_ref[1:2, :]
    g2 = ln_ref[2:3, :]
    b2 = ln_ref[3:4, :]

    @pl.when(branch == 0)
    def _prologue():
        # LayerNorm (bn1), f32 statistics; computed once per batch block.
        x = x_ref[...].astype(jnp.float32)                        # (bt, lp, C)
        mu = jnp.mean(x, axis=-1, keepdims=True)
        var = jnp.mean(jnp.square(x - mu), axis=-1, keepdims=True)
        xn_ref[...] = (x - mu) * lax.rsqrt(var + eps) * g1 + b1
        # Hoisted bias: attention-weighted conv biases, added once per block.
        att = att_ref[...]                                         # (bt, lp, nb)
        acc = att[:, :, 0:1] * bias_ref[0:1, :]
        for i in range(1, nb):
            acc = acc + att[:, :, i:i + 1] * bias_ref[i:i + 1, :]
        acc_ref[...] = acc.reshape(M, C)

    # Local (within-sequence) row index: zeros out rows that the flattened
    # sublane rotation pulled across sequence / padding boundaries.
    rows3 = lax.broadcasted_iota(jnp.int32, (bt, lp, 1), 1)
    xn3 = xn_ref[...]                                              # (bt, lp, C)
    xn2 = xn3.reshape(M, C)

    # One dilation branch per inner grid step (static shift per pl.when body).
    for idx, d in enumerate(dilations):
        def _branch(idx=idx, d=d):
            a3 = att_ref[...][:, :, idx:idx + 1]                   # (bt, lp, 1)
            # prev[l] = xn[l-d], next[l] = xn[l+d] (zero outside true sequence)
            prev = jnp.where(rows3 >= d,
                             pltpu.roll(xn2, d, axis=0).reshape(bt, lp, C), 0.0)
            nxt = jnp.where(rows3 < seq_len - d,
                            pltpu.roll(xn2, M - d, axis=0).reshape(bt, lp, C), 0.0)
            # a*(prev @ Wp - nxt @ Wn) == concat(a*prev, a*nxt) @ [Wp ; -Wn]
            lhs = jnp.concatenate([prev * a3, nxt * a3], axis=-1)
            lhs = lhs.reshape(M, 2 * C).astype(jnp.bfloat16)
            acc_ref[...] += jnp.dot(lhs, w_ref[0],
                                    preferred_element_type=jnp.float32)
        pl.when(branch == idx)(_branch)

    @pl.when(branch == nb - 1)
    def _epilogue():
        # ReLU -> LayerNorm (bn2) -> residual, written once per batch block.
        y = jnp.maximum(acc_ref[...], 0.0)                         # (M, C)
        mu2 = jnp.mean(y, axis=-1, keepdims=True)
        var2 = jnp.mean(jnp.square(y - mu2), axis=-1, keepdims=True)
        y = (y - mu2) * lax.rsqrt(var2 + eps) * g2 + b2
        o_ref[...] = (y.reshape(bt, lp, C) + xn3).astype(o_ref.dtype)


def dil_conv_forward(params, x, muti_att, *, b_tile=8):
    """Fused Pallas dil_conv forward.  x: (N, L, C), muti_att: (N, 4, L)."""
    N, L, C = x.shape
    nb = len(DILATIONS)
    b_tile = max(1, min(b_tile, N))

    # Pad L to a sublane multiple (60 -> 64 at full scale) and N to a multiple
    # of the batch tile; padded rows are masked in-kernel and sliced off below.
    L_pad = ((L + 7) // 8) * 8
    N_pad = ((N + b_tile - 1) // b_tile) * b_tile

    att = jnp.swapaxes(muti_att, 1, 2).astype(jnp.float32)        # (N, L, nb)
    if (N_pad, L_pad) != (N, L):
        x = jnp.pad(x, ((0, N_pad - N), (0, L_pad - L), (0, 0)))
        att = jnp.pad(att, ((0, N_pad - N), (0, L_pad - L), (0, 0)))

    ln = jnp.stack([params["ln1_g"], params["ln1_b"],
                    params["ln2_g"], params["ln2_b"]], axis=0).astype(jnp.float32)
    # conv_w[idx] is (2C, C) with interleaved input rows 2*c+p (p=0 multiplies
    # x[l-d], p=1 multiplies -x[l+d]).  Merge the two halves into a single
    # (2C, C) weight per branch with the "next" half pre-negated, so each branch
    # is ONE K=2C MXU dot and the interleaved im2col tensor never exists.
    w_all = jnp.stack(
        [jnp.concatenate([w[0::2, :], -w[1::2, :]], axis=0)
         for w in params["conv_w"]], axis=0).astype(jnp.bfloat16)  # (nb, 2C, C)
    bias = jnp.stack(params["conv_b"], axis=0).astype(jnp.float32)  # (nb, C)

    kernel = functools.partial(_dil_conv_kernel, dilations=DILATIONS,
                               seq_len=L, eps=EPS)
    out = pl.pallas_call(
        kernel,
        out_shape=jax.ShapeDtypeStruct((N_pad, L_pad, C), x.dtype),
        grid=(N_pad // b_tile, nb),
        in_specs=[
            pl.BlockSpec((b_tile, L_pad, C), lambda b, d: (b, 0, 0)),    # x
            pl.BlockSpec((b_tile, L_pad, nb), lambda b, d: (b, 0, 0)),   # att
            pl.BlockSpec((4, C), lambda b, d: (0, 0)),                   # LN params
            pl.BlockSpec((1, 2 * C, C), lambda b, d: (d, 0, 0)),         # weights (streamed per branch)
            pl.BlockSpec((nb, C), lambda b, d: (0, 0)),                  # conv biases
        ],
        out_specs=pl.BlockSpec((b_tile, L_pad, C), lambda b, d: (b, 0, 0)),
        scratch_shapes=[
            pltpu.VMEM((b_tile, L_pad, C), jnp.float32),    # LN1 output (xn)
            pltpu.VMEM((b_tile * L_pad, C), jnp.float32),   # f32 accumulator
        ],
        compiler_params=pltpu.CompilerParams(
            dimension_semantics=("parallel", "arbitrary")),
    )(x, att, ln, w_all, bias)
    return out[:N, :L, :]


def dil_conv_reference(params, x, muti_att):
    """Pure-JAX f32 mirror of the PyTorch dil_conv.forward (verification only)."""
    N, L, C = x.shape

    def layernorm(v, g, b):
        mu = jnp.mean(v, axis=-1, keepdims=True)
        var = jnp.mean(jnp.square(v - mu), axis=-1, keepdims=True)
        return (v - mu) / jnp.sqrt(var + EPS) * g + b

    xn = layernorm(x, params["ln1_g"], params["ln1_b"])
    res = xn
    branches = []
    for idx, d in enumerate(DILATIONS):
        prev = jnp.pad(xn, ((0, 0), (d, 0), (0, 0)))[:, :L, :]     # x[l-d]
        nxt = jnp.pad(xn, ((0, 0), (0, d), (0, 0)))[:, d:, :]      # x[l+d]
        inter = jnp.stack([prev, -nxt], axis=-1).reshape(N, L, 2 * C)
        branches.append(inter @ params["conv_w"][idx] + params["conv_b"][idx])
    y = jnp.sum(jnp.stack(branches, axis=1) * muti_att[:, :, :, None], axis=1)
    y = jnp.maximum(y, 0.0)
    y = layernorm(y, params["ln2_g"], params["ln2_b"])
    return y + res


def init_params(key, C):
    keys = jax.random.split(key, 8)
    return {
        "ln1_g": jnp.ones((C,), jnp.float32),
        "ln1_b": jnp.zeros((C,), jnp.float32),
        "ln2_g": jnp.ones((C,), jnp.float32),
        "ln2_b": jnp.zeros((C,), jnp.float32),
        "conv_w": [0.05 * jax.random.normal(keys[i], (2 * C, C), jnp.float32)
                   for i in range(4)],
        "conv_b": [0.05 * jax.random.normal(keys[4 + i], (C,), jnp.float32)
                   for i in range(4)],
    }


if __name__ == "__main__":
    N, L, C = 4, 16, 128        # scaled: channels 2048 -> 128, seq 60 -> 16
    key = jax.random.PRNGKey(0)
    kp, kx, ka = jax.random.split(key, 3)
    params = init_params(kp, C)
    x = jax.random.normal(kx, (N, L, C), jnp.float32)
    # In the enclosing model muti_att is a softmax over the 4 dilation branches.
    muti_att = jax.nn.softmax(jax.random.normal(ka, (N, 4, L), jnp.float32), axis=1)

    # b_tile=2 -> 2 batch blocks: exercises the (parallel, arbitrary) grid and
    # the per-block scratch re-initialization.
    fwd = jax.jit(functools.partial(dil_conv_forward, b_tile=2))
    out = fwd(params, x, muti_att)
    jax.block_until_ready(out)

    ref = dil_conv_reference(params, x, muti_att)
    err = float(jnp.max(jnp.abs(out - ref)))
    assert out.shape == (N, L, C)
    # Loose tolerance: bf16 MXU operands vs f32 reference (intentional trade).
    assert err < 0.15, f"max abs error vs f32 reference too large: {err}"
    print("KERNEL_OK")
</pallas_src>

<mosaic_0001>
module attributes {stable_mosaic.version = 11 : i64} {
  func.func @_dil_conv_kernel(%arg0: i32, %arg1: i32, %arg2: memref<2x16x128xf32, #tpu.memory_space<vmem>>, %arg3: memref<2x16x4xf32, #tpu.memory_space<vmem>>, %arg4: memref<4x128xf32, #tpu.memory_space<vmem>>, %arg5: memref<1x256x128xbf16, #tpu.memory_space<vmem>>, %arg6: memref<4x128xf32, #tpu.memory_space<vmem>>, %arg7: memref<2x16x128xf32, #tpu.memory_space<vmem>>, %arg8: memref<2x16x128xf32, #tpu.memory_space<vmem>>, %arg9: memref<32x128xf32, #tpu.memory_space<vmem>>) attributes {dimension_semantics = [#tpu.dimension_semantics<parallel>, #tpu.dimension_semantics<arbitrary>], iteration_bounds = array<i64: 2, 4>, scalar_prefetch = 0 : i64, scratch_operands = 2 : i64, tpu.core_type = #tpu.core_type<tc>, window_params = [{transform_indices = @transform_0, window_bounds = array<i64: 2, 16, 128>}, {transform_indices = @transform_1, window_bounds = array<i64: 2, 16, 4>}, {pipeline_mode = #tpu.pipeline_mode<synchronous>, transform_indices = @transform_2, window_bounds = array<i64: 4, 128>}, {transform_indices = @transform_3, window_bounds = array<i64: 1, 256, 128>}, {pipeline_mode = #tpu.pipeline_mode<synchronous>, transform_indices = @transform_4, window_bounds = array<i64: 4, 128>}, {transform_indices = @transform_5, window_bounds = array<i64: 2, 16, 128>}]} {
    %c0 = arith.constant 0 : index
    %c0_0 = arith.constant 0 : index
    %0 = vector.load %arg4[%c0, %c0_0] : memref<4x128xf32, #tpu.memory_space<vmem>>, vector<1x128xf32>
    %c1 = arith.constant 1 : index
    %c0_1 = arith.constant 0 : index
    %1 = vector.load %arg4[%c1, %c0_1] : memref<4x128xf32, #tpu.memory_space<vmem>>, vector<1x128xf32>
    %c2 = arith.constant 2 : index
    %c0_2 = arith.constant 0 : index
    %2 = vector.load %arg4[%c2, %c0_2] : memref<4x128xf32, #tpu.memory_space<vmem>>, vector<1x128xf32>
    %c3 = arith.constant 3 : index
    %c0_3 = arith.constant 0 : index
    %3 = vector.load %arg4[%c3, %c0_3] : memref<4x128xf32, #tpu.memory_space<vmem>>, vector<1x128xf32>
    %c0_i32 = arith.constant 0 : i32
    %4 = arith.cmpi eq, %arg1, %c0_i32 : i32
    %5 = arith.extui %4 : i1 to i32
    %c0_i32_4 = arith.constant 0 : i32
    %6 = arith.cmpi ne, %5, %c0_i32_4 : i32
    scf.if %6 {
      %c0_15 = arith.constant 0 : index
      %c0_16 = arith.constant 0 : index
      %c0_17 = arith.constant 0 : index
      %25 = vector.load %arg2[%c0_15, %c0_16, %c0_17] : memref<2x16x128xf32, #tpu.memory_space<vmem>>, vector<2x16x128xf32>
      %cst = arith.constant dense<0.000000e+00> : vector<2x16xf32>
      %26 = vector.multi_reduction <add>, %25, %cst [2] : vector<2x16x128xf32> to vector<2x16xf32>
      %27 = vector.shape_cast %26 : vector<2x16xf32> to vector<2x16x1xf32>
      %cst_18 = arith.constant 1.280000e+02 : f32
      %28 = vector.broadcast %cst_18 : f32 to vector<2x16x1xf32>
      %29 = arith.divf %27, %28 : vector<2x16x1xf32>
      %30 = vector.broadcast %29 : vector<2x16x1xf32> to vector<2x16x128xf32>
      %31 = arith.subf %25, %30 : vector<2x16x128xf32>
      %32 = arith.mulf %31, %31 : vector<2x16x128xf32>
      %cst_19 = arith.constant dense<0.000000e+00> : vector<2x16xf32>
      %33 = vector.multi_reduction <add>, %32, %cst_19 [2] : vector<2x16x128xf32> to vector<2x16xf32>
      %34 = vector.shape_cast %33 : vector<2x16xf32> to vector<2x16x1xf32>
      %cst_20 = arith.constant 1.280000e+02 : f32
      %35 = vector.broadcast %cst_20 : f32 to vector<2x16x1xf32>
      %36 = arith.divf %34, %35 : vector<2x16x1xf32>
      %37 = vector.broadcast %29 : vector<2x16x1xf32> to vector<2x16x128xf32>
      %38 = arith.subf %25, %37 : vector<2x16x128xf32>
      %cst_21 = arith.constant 9.99999974E-6 : f32
      %39 = vector.broadcast %cst_21 : f32 to vector<2x16x1xf32>
      %40 = arith.addf %36, %39 : vector<2x16x1xf32>
      %41 = math.rsqrt %40 : vector<2x16x1xf32>
      %42 = vector.broadcast %41 : vector<2x16x1xf32> to vector<2x16x128xf32>
      %43 = arith.mulf %38, %42 : vector<2x16x128xf32>
      %44 = vector.shape_cast %0 : vector<1x128xf32> to vector<1x1x128xf32>
      %45 = vector.broadcast %44 : vector<1x1x128xf32> to vector<2x16x128xf32>
      %46 = arith.mulf %43, %45 : vector<2x16x128xf32>
      %47 = vector.shape_cast %1 : vector<1x128xf32> to vector<1x1x128xf32>
      %48 = vector.broadcast %47 : vector<1x1x128xf32> to vector<2x16x128xf32>
      %49 = arith.addf %46, %48 : vector<2x16x128xf32>
      %c0_22 = arith.constant 0 : index
      %c0_23 = arith.constant 0 : index
      %c0_24 = arith.constant 0 : index
      %50 = vector.load %arg8[%c0_22, %c0_23, %c0_24] : memref<2x16x128xf32, #tpu.memory_space<vmem>>, vector<2x16x128xf32>
      tpu.vector_store %arg8[%c0_22, %c0_23, %c0_24], %49 {strides = array<i32>} : memref<2x16x128xf32, #tpu.memory_space<vmem>>, vector<2x16x128xf32>,
      %c0_25 = arith.constant 0 : index
      %c0_26 = arith.constant 0 : index
      %c0_27 = arith.constant 0 : index
      %51 = vector.load %arg3[%c0_25, %c0_26, %c0_27] : memref<2x16x4xf32, #tpu.memory_space<vmem>>, vector<2x16x4xf32>
      %52 = vector.extract_strided_slice %51 {offsets = [0, 0, 0], sizes = [2, 16, 1], strides = [1, 1, 1]} : vector<2x16x4xf32> to vector<2x16x1xf32>
      %c0_28 = arith.constant 0 : index
      %c0_29 = arith.constant 0 : index
      %53 = vector.load %arg6[%c0_28, %c0_29] : memref<4x128xf32, #tpu.memory_space<vmem>>, vector<1x128xf32>
      %54 = vector.shape_cast %53 : vector<1x128xf32> to vector<1x1x128xf32>
      %55 = vector.broadcast %52 : vector<2x16x1xf32> to vector<2x16x128xf32>
      %56 = vector.broadcast %54 : vector<1x1x128xf32> to vector<2x16x128xf32>
      %57 = arith.mulf %55, %56 : vector<2x16x128xf32>
      %58 = vector.extract_strided_slice %51 {offsets = [0, 0, 1], sizes = [2, 16, 1], strides = [1, 1, 1]} : vector<2x16x4xf32> to vector<2x16x1xf32>
      %c1_30 = arith.constant 1 : index
      %c0_31 = arith.constant 0 : index
      %59 = vector.load %arg6[%c1_30, %c0_31] : memref<4x128xf32, #tpu.memory_space<vmem>>, vector<1x128xf32>
      %60 = vector.shape_cast %59 : vector<1x128xf32> to vector<1x1x128xf32>
      %61 = vector.broadcast %58 : vector<2x16x1xf32> to vector<2x16x128xf32>
      %62 = vector.broadcast %60 : vector<1x1x128xf32> to vector<2x16x128xf32>
      %63 = arith.mulf %61, %62 : vector<2x16x128xf32>
      %64 = arith.addf %57, %63 : vector<2x16x128xf32>
      %65 = vector.extract_strided_slice %51 {offsets = [0, 0, 2], sizes = [2, 16, 1], strides = [1, 1, 1]} : vector<2x16x4xf32> to vector<2x16x1xf32>
      %c2_32 = arith.constant 2 : index
      %c0_33 = arith.constant 0 : index
      %66 = vector.load %arg6[%c2_32, %c0_33] : memref<4x128xf32, #tpu.memory_space<vmem>>, vector<1x128xf32>
      %67 = vector.shape_cast %66 : vector<1x128xf32> to vector<1x1x128xf32>
      %68 = vector.broadcast %65 : vector<2x16x1xf32> to vector<2x16x128xf32>
      %69 = vector.broadcast %67 : vector<1x1x128xf32> to vector<2x16x128xf32>
      %70 = arith.mulf %68, %69 : vector<2x16x128xf32>
      %71 = arith.addf %64, %70 : vector<2x16x128xf32>
      %72 = vector.extract_strided_slice %51 {offsets = [0, 0, 3], sizes = [2, 16, 1], strides = [1, 1, 1]} : vector<2x16x4xf32> to vector<2x16x1xf32>
      %c3_34 = arith.constant 3 : index
      %c0_35 = arith.constant 0 : index
      %73 = vector.load %arg6[%c3_34, %c0_35] : memref<4x128xf32, #tpu.memory_space<vmem>>, vector<1x128xf32>
      %74 = vector.shape_cast %73 : vector<1x128xf32> to vector<1x1x128xf32>
      %75 = vector.broadcast %72 : vector<2x16x1xf32> to vector<2x16x128xf32>
      %76 = vector.broadcast %74 : vector<1x1x128xf32> to vector<2x16x128xf32>
      %77 = arith.mulf %75, %76 : vector<2x16x128xf32>
      %78 = arith.addf %71, %77 : vector<2x16x128xf32>
      %79 = vector.shape_cast %78 : vector<2x16x128xf32> to vector<32x128xf32>
      %c0_36 = arith.constant 0 : index
      %c0_37 = arith.constant 0 : index
      %80 = vector.load %arg9[%c0_36, %c0_37] : memref<32x128xf32, #tpu.memory_space<vmem>>, vector<32x128xf32>
      tpu.vector_store %arg9[%c0_36, %c0_37], %79 {strides = array<i32>} : memref<32x128xf32, #tpu.memory_space<vmem>>, vector<32x128xf32>,
    } else {
    }
    %7 = tpu.iota {dimensions = array<i32: 1>} : vector<2x16x1xi32>
    %c0_5 = arith.constant 0 : index
    %c0_6 = arith.constant 0 : index
    %c0_7 = arith.constant 0 : index
    %8 = vector.load %arg8[%c0_5, %c0_6, %c0_7] : memref<2x16x128xf32, #tpu.memory_space<vmem>>, vector<2x16x128xf32>
    %9 = vector.shape_cast %8 : vector<2x16x128xf32> to vector<32x128xf32>
    %c0_i32_8 = arith.constant 0 : i32
    %10 = arith.cmpi eq, %arg1, %c0_i32_8 : i32
    %11 = arith.extui %10 : i1 to i32
    %c0_i32_9 = arith.constant 0 : i32
    %12 = arith.cmpi ne, %11, %c0_i32_9 : i32
    scf.if %12 {
      %c0_15 = arith.constant 0 : index
      %c0_16 = arith.constant 0 : index
      %c0_17 = arith.constant 0 : index
      %25 = vector.load %arg3[%c0_15, %c0_16, %c0_17] : memref<2x16x4xf32, #tpu.memory_space<vmem>>, vector<2x16x4xf32>
      %26 = vector.extract_strided_slice %25 {offsets = [0, 0, 0], sizes = [2, 16, 1], strides = [1, 1, 1]} : vector<2x16x4xf32> to vector<2x16x1xf32>
      %c1_i32_18 = arith.constant 1 : i32
      %27 = vector.broadcast %c1_i32_18 : i32 to vector<2x16x1xi32>
      %28 = arith.cmpi sge, %7, %27 : vector<2x16x1xi32>
      %c1_i32_19 = arith.constant 1 : i32
      %29 = tpu.dynamic_rotate %9 by %c1_i32_19 dim 0 : vector<32x128xf32>, i32 -> vector<32x128xf32>
      %30 = vector.shape_cast %29 : vector<32x128xf32> to vector<2x16x128xf32>
      %cst = arith.constant 0.000000e+00 : f32
      %31 = vector.shape_cast %28 : vector<2x16x1xi1> to vector<2x16x1xi1>
      %32 = vector.broadcast %31 : vector<2x16x1xi1> to vector<2x16x128xi1>
      %33 = vector.broadcast %cst : f32 to vector<2x16x128xf32>
      %34 = arith.select %32, %30, %33 : vector<2x16x128xi1>, vector<2x16x128xf32>
      %c15_i32 = arith.constant 15 : i32
      %35 = vector.broadcast %c15_i32 : i32 to vector<2x16x1xi32>
      %36 = arith.cmpi slt, %7, %35 : vector<2x16x1xi32>
      %c31_i32 = arith.constant 31 : i32
      %37 = tpu.dynamic_rotate %9 by %c31_i32 dim 0 : vector<32x128xf32>, i32 -> vector<32x128xf32>
      %38 = vector.shape_cast %37 : vector<32x128xf32> to vector<2x16x128xf32>
      %cst_20 = arith.constant 0.000000e+00 : f32
      %39 = vector.shape_cast %36 : vector<2x16x1xi1> to vector<2x16x1xi1>
      %40 = vector.broadcast %39 : vector<2x16x1xi1> to vector<2x16x128xi1>
      %41 = vector.broadcast %cst_20 : f32 to vector<2x16x128xf32>
      %42 = arith.select %40, %38, %41 : vector<2x16x128xi1>, vector<2x16x128xf32>
      %43 = vector.broadcast %26 : vector<2x16x1xf32> to vector<2x16x128xf32>
      %44 = arith.mulf %34, %43 : vector<2x16x128xf32>
      %45 = vector.broadcast %26 : vector<2x16x1xf32> to vector<2x16x128xf32>
      %46 = arith.mulf %42, %45 : vector<2x16x128xf32>
      %47 = tpu.concatenate %44, %46 in 2 : vector<2x16x128xf32>, vector<2x16x128xf32> -> vector<2x16x256xf32>
      %48 = vector.shape_cast %47 : vector<2x16x256xf32> to vector<32x256xf32>
      %49 = arith.truncf %48 : vector<32x256xf32> to vector<32x256xbf16>
      %c0_21 = arith.constant 0 : index
      %c0_22 = arith.constant 0 : index
      %50 = vector.load %arg9[%c0_21, %c0_22] : memref<32x128xf32, #tpu.memory_space<vmem>>, vector<32x128xf32>
      %c0_23 = arith.constant 0 : index
      %c0_24 = arith.constant 0 : index
      %c0_25 = arith.constant 0 : index
      %51 = vector.load %arg5[%c0_23, %c0_24, %c0_25] : memref<1x256x128xbf16, #tpu.memory_space<vmem>>, vector<1x256x128xbf16>
      %52 = vector.shape_cast %51 : vector<1x256x128xbf16> to vector<256x128xbf16>
      %cst_26 = arith.constant dense<0.000000e+00> : vector<32x128xf32>
      %53 = tpu.matmul %49, %52, %cst_26 {dimension_numbers = #tpu.dot_dimension_numbers<[1], [0], [0], [1], [0, 0, 1, 1], [], []>} : vector<32x256xbf16>, vector<256x128xbf16>, vector<32x128xf32> -> vector<32x128xf32>
      %54 = arith.addf %50, %53 : vector<32x128xf32>
      %c0_27 = arith.constant 0 : index
      %c0_28 = arith.constant 0 : index
      %55 = vector.load %arg9[%c0_27, %c0_28] : memref<32x128xf32, #tpu.memory_space<vmem>>, vector<32x128xf32>
      tpu.vector_store %arg9[%c0_27, %c0_28], %54 {strides = array<i32>} : memref<32x128xf32, #tpu.memory_space<vmem>>, vector<32x128xf32>,
    } else {
    }
    %c1_i32 = arith.constant 1 : i32
    %13 = arith.cmpi eq, %arg1, %c1_i32 : i32
    %14 = arith.extui %13 : i1 to i32
    %c0_i32_10 = arith.constant 0 : i32
    %15 = arith.cmpi ne, %14, %c0_i32_10 : i32
    scf.if %15 {
      %c0_15 = arith.constant 0 : index
      %c0_16 = arith.constant 0 : index
      %c0_17 = arith.constant 0 : index
      %25 = vector.load %arg3[%c0_15, %c0_16, %c0_17] : memref<2x16x4xf32, #tpu.memory_space<vmem>>, vector<2x16x4xf32>
      %26 = vector.extract_strided_slice %25 {offsets = [0, 0, 1], sizes = [2, 16, 1], strides = [1, 1, 1]} : vector<2x16x4xf32> to vector<2x16x1xf32>
      %c2_i32_18 = arith.constant 2 : i32
      %27 = vector.broadcast %c2_i32_18 : i32 to vector<2x16x1xi32>
      %28 = arith.cmpi sge, %7, %27 : vector<2x16x1xi32>
      %c2_i32_19 = arith.constant 2 : i32
      %29 = tpu.dynamic_rotate %9 by %c2_i32_19 dim 0 : vector<32x128xf32>, i32 -> vector<32x128xf32>
      %30 = vector.shape_cast %29 : vector<32x128xf32> to vector<2x16x128xf32>
      %cst = arith.constant 0.000000e+00 : f32
      %31 = vector.shape_cast %28 : vector<2x16x1xi1> to vector<2x16x1xi1>
      %32 = vector.broadcast %31 : vector<2x16x1xi1> to vector<2x16x128xi1>
      %33 = vector.broadcast %cst : f32 to vector<2x16x128xf32>
      %34 = arith.select %32, %30, %33 : vector<2x16x128xi1>, vector<2x16x128xf32>
      %c14_i32 = arith.constant 14 : i32
      %35 = vector.broadcast %c14_i32 : i32 to vector<2x16x1xi32>
      %36 = arith.cmpi slt, %7, %35 : vector<2x16x1xi32>
      %c30_i32 = arith.constant 30 : i32
      %37 = tpu.dynamic_rotate %9 by %c30_i32 dim 0 : vector<32x128xf32>, i32 -> vector<32x128xf32>
      %38 = vector.shape_cast %37 : vector<32x128xf32> to vector<2x16x128xf32>
      %cst_20 = arith.constant 0.000000e+00 : f32
      %39 = vector.shape_cast %36 : vector<2x16x1xi1> to vector<2x16x1xi1>
      %40 = vector.broadcast %39 : vector<2x16x1xi1> to vector<2x16x128xi1>
      %41 = vector.broadcast %cst_20 : f32 to vector<2x16x128xf32>
      %42 = arith.select %40, %38, %41 : vector<2x16x128xi1>, vector<2x16x128xf32>
      %43 = vector.broadcast %26 : vector<2x16x1xf32> to vector<2x16x128xf32>
      %44 = arith.mulf %34, %43 : vector<2x16x128xf32>
      %45 = vector.broadcast %26 : vector<2x16x1xf32> to vector<2x16x128xf32>
      %46 = arith.mulf %42, %45 : vector<2x16x128xf32>
      %47 = tpu.concatenate %44, %46 in 2 : vector<2x16x128xf32>, vector<2x16x128xf32> -> vector<2x16x256xf32>
      %48 = vector.shape_cast %47 : vector<2x16x256xf32> to vector<32x256xf32>
      %49 = arith.truncf %48 : vector<32x256xf32> to vector<32x256xbf16>
      %c0_21 = arith.constant 0 : index
      %c0_22 = arith.constant 0 : index
      %50 = vector.load %arg9[%c0_21, %c0_22] : memref<32x128xf32, #tpu.memory_space<vmem>>, vector<32x128xf32>
      %c0_23 = arith.constant 0 : index
      %c0_24 = arith.constant 0 : index
      %c0_25 = arith.constant 0 : index
      %51 = vector.load %arg5[%c0_23, %c0_24, %c0_25] : memref<1x256x128xbf16, #tpu.memory_space<vmem>>, vector<1x256x128xbf16>
      %52 = vector.shape_cast %51 : vector<1x256x128xbf16> to vector<256x128xbf16>
      %cst_26 = arith.constant dense<0.000000e+00> : vector<32x128xf32>
      %53 = tpu.matmul %49, %52, %cst_26 {dimension_numbers = #tpu.dot_dimension_numbers<[1], [0], [0], [1], [0, 0, 1, 1], [], []>} : vector<32x256xbf16>, vector<256x128xbf16>, vector<32x128xf32> -> vector<32x128xf32>
      %54 = arith.addf %50, %53 : vector<32x128xf32>
      %c0_27 = arith.constant 0 : index
      %c0_28 = arith.constant 0 : index
      %55 = vector.load %arg9[%c0_27, %c0_28] : memref<32x128xf32, #tpu.memory_space<vmem>>, vector<32x128xf32>
      tpu.vector_store %arg9[%c0_27, %c0_28], %54 {strides = array<i32>} : memref<32x128xf32, #tpu.memory_space<vmem>>, vector<32x128xf32>,
    } else {
    }
    %c2_i32 = arith.constant 2 : i32
    %16 = arith.cmpi eq, %arg1, %c2_i32 : i32
    %17 = arith.extui %16 : i1 to i32
    %c0_i32_11 = arith.constant 0 : i32
    %18 = arith.cmpi ne, %17, %c0_i32_11 : i32
    scf.if %18 {
      %c0_15 = arith.constant 0 : index
      %c0_16 = arith.constant 0 : index
      %c0_17 = arith.constant 0 : index
      %25 = vector.load %arg3[%c0_15, %c0_16, %c0_17] : memref<2x16x4xf32, #tpu.memory_space<vmem>>, vector<2x16x4xf32>
      %26 = vector.extract_strided_slice %25 {offsets = [0, 0, 2], sizes = [2, 16, 1], strides = [1, 1, 1]} : vector<2x16x4xf32> to vector<2x16x1xf32>
      %c4_i32 = arith.constant 4 : i32
      %27 = vector.broadcast %c4_i32 : i32 to vector<2x16x1xi32>
      %28 = arith.cmpi sge, %7, %27 : vector<2x16x1xi32>
      %c4_i32_18 = arith.constant 4 : i32
      %29 = tpu.dynamic_rotate %9 by %c4_i32_18 dim 0 : vector<32x128xf32>, i32 -> vector<32x128xf32>
      %30 = vector.shape_cast %29 : vector<32x128xf32> to vector<2x16x128xf32>
      %cst = arith.constant 0.000000e+00 : f32
      %31 = vector.shape_cast %28 : vector<2x16x1xi1> to vector<2x16x1xi1>
      %32 = vector.broadcast %31 : vector<2x16x1xi1> to vector<2x16x128xi1>
      %33 = vector.broadcast %cst : f32 to vector<2x16x128xf32>
      %34 = arith.select %32, %30, %33 : vector<2x16x128xi1>, vector<2x16x128xf32>
      %c12_i32 = arith.constant 12 : i32
      %35 = vector.broadcast %c12_i32 : i32 to vector<2x16x1xi32>
      %36 = arith.cmpi slt, %7, %35 : vector<2x16x1xi32>
      %c28_i32 = arith.constant 28 : i32
      %37 = tpu.dynamic_rotate %9 by %c28_i32 dim 0 : vector<32x128xf32>, i32 -> vector<32x128xf32>
      %38 = vector.shape_cast %37 : vector<32x128xf32> to vector<2x16x128xf32>
      %cst_19 = arith.constant 0.000000e+00 : f32
      %39 = vector.shape_cast %36 : vector<2x16x1xi1> to vector<2x16x1xi1>
      %40 = vector.broadcast %39 : vector<2x16x1xi1> to vector<2x16x128xi1>
      %41 = vector.broadcast %cst_19 : f32 to vector<2x16x128xf32>
      %42 = arith.select %40, %38, %41 : vector<2x16x128xi1>, vector<2x16x128xf32>
      %43 = vector.broadcast %26 : vector<2x16x1xf32> to vector<2x16x128xf32>
      %44 = arith.mulf %34, %43 : vector<2x16x128xf32>
      %45 = vector.broadcast %26 : vector<2x16x1xf32> to vector<2x16x128xf32>
      %46 = arith.mulf %42, %45 : vector<2x16x128xf32>
      %47 = tpu.concatenate %44, %46 in 2 : vector<2x16x128xf32>, vector<2x16x128xf32> -> vector<2x16x256xf32>
      %48 = vector.shape_cast %47 : vector<2x16x256xf32> to vector<32x256xf32>
      %49 = arith.truncf %48 : vector<32x256xf32> to vector<32x256xbf16>
      %c0_20 = arith.constant 0 : index
      %c0_21 = arith.constant 0 : index
      %50 = vector.load %arg9[%c0_20, %c0_21] : memref<32x128xf32, #tpu.memory_space<vmem>>, vector<32x128xf32>
      %c0_22 = arith.constant 0 : index
      %c0_23 = arith.constant 0 : index
      %c0_24 = arith.constant 0 : index
      %51 = vector.load %arg5[%c0_22, %c0_23, %c0_24] : memref<1x256x128xbf16, #tpu.memory_space<vmem>>, vector<1x256x128xbf16>
      %52 = vector.shape_cast %51 : vector<1x256x128xbf16> to vector<256x128xbf16>
      %cst_25 = arith.constant dense<0.000000e+00> : vector<32x128xf32>
      %53 = tpu.matmul %49, %52, %cst_25 {dimension_numbers = #tpu.dot_dimension_numbers<[1], [0], [0], [1], [0, 0, 1, 1], [], []>} : vector<32x256xbf16>, vector<256x128xbf16>, vector<32x128xf32> -> vector<32x128xf32>
      %54 = arith.addf %50, %53 : vector<32x128xf32>
      %c0_26 = arith.constant 0 : index
      %c0_27 = arith.constant 0 : index
      %55 = vector.load %arg9[%c0_26, %c0_27] : memref<32x128xf32, #tpu.memory_space<vmem>>, vector<32x128xf32>
      tpu.vector_store %arg9[%c0_26, %c0_27], %54 {strides = array<i32>} : memref<32x128xf32, #tpu.memory_space<vmem>>, vector<32x128xf32>,
    } else {
    }
    %c3_i32 = arith.constant 3 : i32
    %19 = arith.cmpi eq, %arg1, %c3_i32 : i32
    %20 = arith.extui %19 : i1 to i32
    %c0_i32_12 = arith.constant 0 : i32
    %21 = arith.cmpi ne, %20, %c0_i32_12 : i32
    scf.if %21 {
      %c0_15 = arith.constant 0 : index
      %c0_16 = arith.constant 0 : index
      %c0_17 = arith.constant 0 : index
      %25 = vector.load %arg3[%c0_15, %c0_16, %c0_17] : memref<2x16x4xf32, #tpu.memory_space<vmem>>, vector<2x16x4xf32>
      %26 = vector.extract_strided_slice %25 {offsets = [0, 0, 3], sizes = [2, 16, 1], strides = [1, 1, 1]} : vector<2x16x4xf32> to vector<2x16x1xf32>
      %c8_i32 = arith.constant 8 : i32
      %27 = vector.broadcast %c8_i32 : i32 to vector<2x16x1xi32>
      %28 = arith.cmpi sge, %7, %27 : vector<2x16x1xi32>
      %c8_i32_18 = arith.constant 8 : i32
      %29 = tpu.dynamic_rotate %9 by %c8_i32_18 dim 0 : vector<32x128xf32>, i32 -> vector<32x128xf32>
      %30 = vector.shape_cast %29 : vector<32x128xf32> to vector<2x16x128xf32>
      %cst = arith.constant 0.000000e+00 : f32
      %31 = vector.shape_cast %28 : vector<2x16x1xi1> to vector<2x16x1xi1>
      %32 = vector.broadcast %31 : vector<2x16x1xi1> to vector<2x16x128xi1>
      %33 = vector.broadcast %cst : f32 to vector<2x16x128xf32>
      %34 = arith.select %32, %30, %33 : vector<2x16x128xi1>, vector<2x16x128xf32>
      %c8_i32_19 = arith.constant 8 : i32
      %35 = vector.broadcast %c8_i32_19 : i32 to vector<2x16x1xi32>
      %36 = arith.cmpi slt, %7, %35 : vector<2x16x1xi32>
      %c24_i32 = arith.constant 24 : i32
      %37 = tpu.dynamic_rotate %9 by %c24_i32 dim 0 : vector<32x128xf32>, i32 -> vector<32x128xf32>
      %38 = vector.shape_cast %37 : vector<32x128xf32> to vector<2x16x128xf32>
      %cst_20 = arith.constant 0.000000e+00 : f32
      %39 = vector.shape_cast %36 : vector<2x16x1xi1> to vector<2x16x1xi1>
      %40 = vector.broadcast %39 : vector<2x16x1xi1> to vector<2x16x128xi1>
      %41 = vector.broadcast %cst_20 : f32 to vector<2x16x128xf32>
      %42 = arith.select %40, %38, %41 : vector<2x16x128xi1>, vector<2x16x128xf32>
      %43 = vector.broadcast %26 : vector<2x16x1xf32> to vector<2x16x128xf32>
      %44 = arith.mulf %34, %43 : vector<2x16x128xf32>
      %45 = vector.broadcast %26 : vector<2x16x1xf32> to vector<2x16x128xf32>
      %46 = arith.mulf %42, %45 : vector<2x16x128xf32>
      %47 = tpu.concatenate %44, %46 in 2 : vector<2x16x128xf32>, vector<2x16x128xf32> -> vector<2x16x256xf32>
      %48 = vector.shape_cast %47 : vector<2x16x256xf32> to vector<32x256xf32>
      %49 = arith.truncf %48 : vector<32x256xf32> to vector<32x256xbf16>
      %c0_21 = arith.constant 0 : index
      %c0_22 = arith.constant 0 : index
      %50 = vector.load %arg9[%c0_21, %c0_22] : memref<32x128xf32, #tpu.memory_space<vmem>>, vector<32x128xf32>
      %c0_23 = arith.constant 0 : index
      %c0_24 = arith.constant 0 : index
      %c0_25 = arith.constant 0 : index
      %51 = vector.load %arg5[%c0_23, %c0_24, %c0_25] : memref<1x256x128xbf16, #tpu.memory_space<vmem>>, vector<1x256x128xbf16>
      %52 = vector.shape_cast %51 : vector<1x256x128xbf16> to vector<256x128xbf16>
      %cst_26 = arith.constant dense<0.000000e+00> : vector<32x128xf32>
      %53 = tpu.matmul %49, %52, %cst_26 {dimension_numbers = #tpu.dot_dimension_numbers<[1], [0], [0], [1], [0, 0, 1, 1], [], []>} : vector<32x256xbf16>, vector<256x128xbf16>, vector<32x128xf32> -> vector<32x128xf32>
      %54 = arith.addf %50, %53 : vector<32x128xf32>
      %c0_27 = arith.constant 0 : index
      %c0_28 = arith.constant 0 : index
      %55 = vector.load %arg9[%c0_27, %c0_28] : memref<32x128xf32, #tpu.memory_space<vmem>>, vector<32x128xf32>
      tpu.vector_store %arg9[%c0_27, %c0_28], %54 {strides = array<i32>} : memref<32x128xf32, #tpu.memory_space<vmem>>, vector<32x128xf32>,
    } else {
    }
    %c3_i32_13 = arith.constant 3 : i32
    %22 = arith.cmpi eq, %arg1, %c3_i32_13 : i32
    %23 = arith.extui %22 : i1 to i32
    %c0_i32_14 = arith.constant 0 : i32
    %24 = arith.cmpi ne, %23, %c0_i32_14 : i32
    scf.if %24 {
      %c0_15 = arith.constant 0 : index
      %c0_16 = arith.constant 0 : index
      %25 = vector.load %arg9[%c0_15, %c0_16] : memref<32x128xf32, #tpu.memory_space<vmem>>, vector<32x128xf32>
      %cst = arith.constant 0.000000e+00 : f32
      %26 = vector.broadcast %cst : f32 to vector<32x128xf32>
      %27 = arith.maximumf %25, %26 : vector<32x128xf32>
      %cst_17 = arith.constant dense<0.000000e+00> : vector<32xf32>
      %28 = vector.multi_reduction <add>, %27, %cst_17 [1] : vector<32x128xf32> to vector<32xf32>
      %29 = vector.shape_cast %28 : vector<32xf32> to vector<32x1xf32>
      %cst_18 = arith.constant 1.280000e+02 : f32
      %30 = vector.broadcast %cst_18 : f32 to vector<32x1xf32>
      %31 = arith.divf %29, %30 : vector<32x1xf32>
      %32 = vector.broadcast %31 : vector<32x1xf32> to vector<32x128xf32>
      %33 = arith.subf %27, %32 : vector<32x128xf32>
      %34 = arith.mulf %33, %33 : vector<32x128xf32>
      %cst_19 = arith.constant dense<0.000000e+00> : vector<32xf32>
      %35 = vector.multi_reduction <add>, %34, %cst_19 [1] : vector<32x128xf32> to vector<32xf32>
      %36 = vector.shape_cast %35 : vector<32xf32> to vector<32x1xf32>
      %cst_20 = arith.constant 1.280000e+02 : f32
      %37 = vector.broadcast %cst_20 : f32 to vector<32x1xf32>
      %38 = arith.divf %36, %37 : vector<32x1xf32>
      %39 = vector.broadcast %31 : vector<32x1xf32> to vector<32x128xf32>
      %40 = arith.subf %27, %39 : vector<32x128xf32>
      %cst_21 = arith.constant 9.99999974E-6 : f32
      %41 = vector.broadcast %cst_21 : f32 to vector<32x1xf32>
      %42 = arith.addf %38, %41 : vector<32x1xf32>
      %43 = math.rsqrt %42 : vector<32x1xf32>
      %44 = vector.broadcast %43 : vector<32x1xf32> to vector<32x128xf32>
      %45 = arith.mulf %40, %44 : vector<32x128xf32>
      %46 = vector.broadcast %2 : vector<1x128xf32> to vector<32x128xf32>
      %47 = arith.mulf %45, %46 : vector<32x128xf32>
      %48 = vector.broadcast %3 : vector<1x128xf32> to vector<32x128xf32>
      %49 = arith.addf %47, %48 : vector<32x128xf32>
      %50 = vector.shape_cast %49 : vector<32x128xf32> to vector<2x16x128xf32>
      %51 = arith.addf %50, %8 : vector<2x16x128xf32>
      %c0_22 = arith.constant 0 : index
      %c0_23 = arith.constant 0 : index
      %c0_24 = arith.constant 0 : index
      %52 = vector.load %arg7[%c0_22, %c0_23, %c0_24] : memref<2x16x128xf32, #tpu.memory_space<vmem>>, vector<2x16x128xf32>
      tpu.vector_store %arg7[%c0_22, %c0_23, %c0_24], %51 {strides = array<i32>} : memref<2x16x128xf32, #tpu.memory_space<vmem>>, vector<2x16x128xf32>,
    } else {
    }
    return
  }
  func.func @transform_0(%arg0: i32, %arg1: i32) -> (i32, i32, i32) {
    %c0_i32 = arith.constant 0 : i32
    %c0_i32_0 = arith.constant 0 : i32
    %c0_i32_1 = arith.constant 0 : i32
    return %arg0, %c0_i32, %c0_i32_0 : i32, i32, i32
  }
  func.func @transform_1(%arg0: i32, %arg1: i32) -> (i32, i32, i32) {
    %c0_i32 = arith.constant 0 : i32
    %c0_i32_0 = arith.constant 0 : i32
    %c0_i32_1 = arith.constant 0 : i32
    return %arg0, %c0_i32, %c0_i32_0 : i32, i32, i32
  }
  func.func @transform_2(%arg0: i32, %arg1: i32) -> (i32, i32) {
    %c0_i32 = arith.constant 0 : i32
    %c0_i32_0 = arith.constant 0 : i32
    %c0_i32_1 = arith.constant 0 : i32
    return %c0_i32, %c0_i32_0 : i32, i32
  }
  func.func @transform_3(%arg0: i32, %arg1: i32) -> (i32, i32, i32) {
    %c0_i32 = arith.constant 0 : i32
    %c0_i32_0 = arith.constant 0 : i32
    %c0_i32_1 = arith.constant 0 : i32
    return %arg1, %c0_i32, %c0_i32_0 : i32, i32, i32
  }
  func.func @transform_4(%arg0: i32, %arg1: i32) -> (i32, i32) {
    %c0_i32 = arith.constant 0 : i32
    %c0_i32_0 = arith.constant 0 : i32
    %c0_i32_1 = arith.constant 0 : i32
    return %c0_i32, %c0_i32_0 : i32, i32
  }
  func.func @transform_5(%arg0: i32, %arg1: i32) -> (i32, i32, i32) {
    %c0_i32 = arith.constant 0 : i32
    %c0_i32_0 = arith.constant 0 : i32
    %c0_i32_1 = arith.constant 0 : i32
    return %arg0, %c0_i32, %c0_i32_0 : i32, i32, i32
  }
}

</mosaic_0001>

<llo_original>
// kernel: dil_conv_forward.1
$region0: #{dil_conv_forward.1}
  #allocation0 [shape = 'u32[]', space=smem, size = 0x4, offset = 0x4, fixed_abs, tag = 'smem constant byte address 0x4 - core index']
  #allocation1 [shape = 'u32[144,128]{1,0:T(1,128)}', space=vmem, size = 0x12000, scoped, tag = 'internal scratch']
  #allocation2 [shape = 'f32[2,16,128]{2,1,0:T(8,128)}', space=vmem, size = 0x4000, scoped, tag = 'scratch operand']
  #allocation3 [shape = 'f32[32,128]{1,0:T(8,128)}', space=vmem, size = 0x4000, scoped, tag = 'scratch operand']
  %s0 = inlined_call_operand.vmem [shape: f32[4,16,128], index: 0, kind: input, shape index: {}]
  %s1 = inlined_call_operand.vmem [shape: f32[4,16,4], index: 1, kind: input, shape index: {}]
  %s2 = inlined_call_operand.vmem [shape: f32[4,128], index: 2, kind: input, shape index: {}]
  %s3 = inlined_call_operand.vmem [shape: bf16[4,256,128], index: 3, kind: input, shape index: {}]
  %s4 = inlined_call_operand.vmem [shape: f32[4,128], index: 4, kind: input, shape index: {}]
  %s5 = inlined_call_operand.hbm [shape: f32[4,16,128], index: 5, kind: output, shape index: {}]
  %s6 = sld [smem:[#allocation0]]
  $region73: #{dil_conv_forward.1} parent=0
    _
  %s8 = ssub.s32 1, %s6
  %s9 = scalar_select 0, %s8, %s6
  $region1: #{dil_conv_forward.1} parent=0
    #allocation4 [shape = 'u8[32768]{0}', space=vmem, size = 0x8000, scoped, tag = 'output window, operand 0']
    #allocation5 [shape = 's32[2]{0}', space=sflag, size = 0x8, scoped, tag = 'scoped memory for dil_conv_forward.1']
    %10 = vsyncpa [#allocation5], 0
    %s11 = scalar_lea.sflag [#allocation5], 1
    %12 = vsyncpa %s11, 0
    loop: start=0, step=1, limit=10
    $region2: #{dil_conv_forward.1} parent=1 // loop_pre_header
      _
    $region3: #{dil_conv_forward.1} parent=1 // loop_header
      %s14 = sphi 0, %s18
      %p15 = scmp.ge.s32.totalorder %s14, 10
      %s21 = sphi 0, %s33
      %s22 = sphi 0, %s29
      %s23 = sphi 0, %s21
      %s24 = sphi 0, %s22
      %s25 = sphi 0, %s23
      %s26 = sphi 0, %s24
      %s36 = sphi 0, %s38
      %s39 = sphi 0, %s36
      %s40 = sphi 0, %s39
      %s56 = sphi 0, %s40
      %s62 = sphi 0, %s64
      %s65 = sphi 0, %s62
      %s66 = sphi 0, %s65
      %s82 = sphi 0, %s66
      %s86 = sphi 0, %s86
      %s88 = sphi 0, %s86
      %s89 = sphi 0, %s88
      %s103 = sphi 0, %s89
      %s109 = sphi 0, %s111
      %s112 = sphi 0, %s109
      %s113 = sphi 0, %s112
      %s129 = sphi 0, %s113
      %s133 = sphi 0, %s133
      %s135 = sphi 0, %s133
      %s136 = sphi 0, %s135
      %s150 = sphi 0, %s136
      %s156 = sphi 0, %s158
      %s159 = sphi 0, %s156
      %s160 = sphi 0, %s159
      %s176 = sphi 0, %s160
    $region4: #{dil_conv_forward.1} parent=1 // loop_header_branch
      %17 = sbr.rel (%p15) target = $region8
    $region5: #{dil_conv_forward.1} parent=1 // loop_body
      %s19 = ssub.s32 %s14, 1
      %s20 = ssub.s32 %s14, 2
      %s27 = sadd.s32 1, %s22
      %p28 = scmp.ge.s32.totalorder %s27, 4
      %s29 = scalar_select %p28, 0, %s27
      %s30 = sadd.s32 1, %s21
      %s31 = scalar_select %p28, %s30, %s21
      %p32 = scmp.ge.s32.totalorder %s31, 2
      %s33 = scalar_select %p32, 0, %s31
      %s34 = ssub.s32 %s21, %s33
      %p35 = scmp.eq.s32.totalorder %s34, 0
      %s37 = sadd.s32 %s36, 1
      %s38 = scalar_select %p35, %s36, %s37
      %p41 = pneg %p35
      %p42 = scmp.eq.s32.totalorder %s14, 7
      %p43 = por %p41, %p42
      %p44 = scmp.ne.s32.totalorder %s36, %s39
      %p45 = scmp.eq.s32.totalorder %s14, 0
      %p46 = por %p44, %p45
      %p47 = scmp.ne.s32.totalorder %s36, %s39
      %p48 = scmp.eq.s32.totalorder %s19, 7
      %p49 = por %p47, %p48
      %p50 = scmp.ne.s32.totalorder %s39, %s40
      %p51 = scmp.eq.s32.totalorder %s19, 0
      %p52 = por %p50, %p51
      %p53 = scmp.ne.s32.totalorder %s39, %s40
      %p54 = scmp.eq.s32.totalorder %s20, 7
      %p55 = por %p53, %p54
      %p57 = scmp.ne.s32.totalorder %s40, %s56
      %p58 = scmp.eq.s32.totalorder %s20, 0
      %p59 = por %p57, %p58
      %s60 = ssub.s32 %s21, %s33
      %p61 = scmp.eq.s32.totalorder %s60, 0
      %s63 = sadd.s32 %s62, 1
      %s64 = scalar_select %p61, %s62, %s63
      %p67 = pneg %p61
      %p68 = scmp.eq.s32.totalorder %s14, 7
      %p69 = por %p67, %p68
      %p70 = scmp.ne.s32.totalorder %s62, %s65
      %p71 = scmp.eq.s32.totalorder %s14, 0
      %p72 = por %p70, %p71
      %p73 = scmp.ne.s32.totalorder %s62, %s65
      %p74 = scmp.eq.s32.totalorder %s19, 7
      %p75 = por %p73, %p74
      %p76 = scmp.ne.s32.totalorder %s65, %s66
      %p77 = scmp.eq.s32.totalorder %s19, 0
      %p78 = por %p76, %p77
      %p79 = scmp.ne.s32.totalorder %s65, %s66
      %p80 = scmp.eq.s32.totalorder %s20, 7
      %p81 = por %p79, %p80
      %p83 = scmp.ne.s32.totalorder %s66, %s82
      %p84 = scmp.eq.s32.totalorder %s20, 0
      %p85 = por %p83, %p84
      %s87 = sadd.s32 %s86, 1
      %p90 = scmp.eq.s32.totalorder %s14, 7
      %p91 = scmp.ne.s32.totalorder %s86, %s88
      %p92 = scmp.eq.s32.totalorder %s14, 0
      %p93 = por %p91, %p92
      %p94 = scmp.ne.s32.totalorder %s86, %s88
      %p95 = scmp.eq.s32.totalorder %s19, 7
      %p96 = por %p94, %p95
      %p97 = scmp.ne.s32.totalorder %s88, %s89
      %p98 = scmp.eq.s32.totalorder %s19, 0
      %p99 = por %p97, %p98
      %p100 = scmp.ne.s32.totalorder %s88, %s89
      %p101 = scmp.eq.s32.totalorder %s20, 7
      %p102 = por %p100, %p101
      %p104 = scmp.ne.s32.totalorder %s89, %s103
      %p105 = scmp.eq.s32.totalorder %s20, 0
      %p106 = por %p104, %p105
      %s107 = ssub.s32 %s22, %s29
      %p108 = scmp.eq.s32.totalorder %s107, 0
      %s110 = sadd.s32 %s109, 1
      %s111 = scalar_select %p108, %s109, %s110
      %p114 = pneg %p108
      %p115 = scmp.eq.s32.totalorder %s14, 7
      %p116 = por %p114, %p115
      %p117 = scmp.ne.s32.totalorder %s109, %s112
      %p118 = scmp.eq.s32.totalorder %s14, 0
      %p119 = por %p117, %p118
      %p120 = scmp.ne.s32.totalorder %s109, %s112
      %p121 = scmp.eq.s32.totalorder %s19, 7
      %p122 = por %p120, %p121
      %p123 = scmp.ne.s32.totalorder %s112, %s113
      %p124 = scmp.eq.s32.totalorder %s19, 0
      %p125 = por %p123, %p124
      %p126 = scmp.ne.s32.totalorder %s112, %s113
      %p127 = scmp.eq.s32.totalorder %s20, 7
      %p128 = por %p126, %p127
      %p130 = scmp.ne.s32.totalorder %s113, %s129
      %p131 = scmp.eq.s32.totalorder %s20, 0
      %p132 = por %p130, %p131
      %s134 = sadd.s32 %s133, 1
      %p137 = scmp.eq.s32.totalorder %s14, 7
      %p138 = scmp.ne.s32.totalorder %s133, %s135
      %p139 = scmp.eq.s32.totalorder %s14, 0
      %p140 = por %p138, %p139
      %p141 = scmp.ne.s32.totalorder %s133, %s135
      %p142 = scmp.eq.s32.totalorder %s19, 7
      %p143 = por %p141, %p142
      %p144 = scmp.ne.s32.totalorder %s135, %s136
      %p145 = scmp.eq.s32.totalorder %s19, 0
      %p146 = por %p144, %p145
      %p147 = scmp.ne.s32.totalorder %s135, %s136
      %p148 = scmp.eq.s32.totalorder %s20, 7
      %p149 = por %p147, %p148
      %p151 = scmp.ne.s32.totalorder %s136, %s150
      %p152 = scmp.eq.s32.totalorder %s20, 0
      %p153 = por %p151, %p152
      %s154 = ssub.s32 %s21, %s33
      %p155 = scmp.eq.s32.totalorder %s154, 0
      %s157 = sadd.s32 %s156, 1
      %s158 = scalar_select %p155, %s156, %s157
      %p161 = pneg %p155
      %p162 = scmp.eq.s32.totalorder %s14, 7
      %p163 = por %p161, %p162
      %p164 = scmp.ne.s32.totalorder %s156, %s159
      %p165 = scmp.eq.s32.totalorder %s14, 0
      %p166 = por %p164, %p165
      %p167 = scmp.ne.s32.totalorder %s156, %s159
      %p168 = scmp.eq.s32.totalorder %s19, 7
      %p169 = por %p167, %p168
      %p170 = scmp.ne.s32.totalorder %s159, %s160
      %p171 = scmp.eq.s32.totalorder %s19, 0
      %p172 = por %p170, %p171
      %p173 = scmp.ne.s32.totalorder %s159, %s160
      %p174 = scmp.eq.s32.totalorder %s20, 7
      %p175 = por %p173, %p174
      %p177 = scmp.ne.s32.totalorder %s160, %s176
      %p178 = scmp.eq.s32.totalorder %s20, 0
      %p179 = por %p177, %p178
      %p180 = scmp.le.s32.totalorder 1, %s14
      %p181 = scmp.lt.s32.totalorder %s14, 9
      %p182 = pnand %p180, %p181
      %p183 = pneg %p182
      // Predicated region
      $region9: #{dil_conv_forward.1} parent=5 // pred_check
        _
      $region10: #{dil_conv_forward.1} parent=5 // pred_check_branch
        %185 = sbr.rel (%p182) target = $region12
      $region11: #{dil_conv_forward.1} parent=5 // pred_region
        %s186 = ssub.s32 %s14, 1
        // Predicated region
        $region13: #{dil_conv_forward.1} parent=11 // pred_check
          %p187 = pneg %p99
        $region14: #{dil_conv_forward.1} parent=11 // pred_check_branch
          %189 = sbr.rel (%p187) target = $region16
        $region15: #{dil_conv_forward.1} parent=11 // pred_region
          _
        $region16: #{dil_conv_forward.1} parent=11 // pred_fallthru
          _
        // Predicated region
        $region17: #{dil_conv_forward.1} parent=11 // pred_check
          %p190 = pneg %p146
        $region18: #{dil_conv_forward.1} parent=11 // pred_check_branch
          %192 = sbr.rel (%p190) target = $region20
        $region19: #{dil_conv_forward.1} parent=11 // pred_region
          _
        $region20: #{dil_conv_forward.1} parent=11 // pred_fallthru
          _
      $region12: #{dil_conv_forward.1} parent=5 // pred_fallthru
        _
      %p193 = scmp.lt.s32.totalorder %s14, 8
      // Predicated region
      $region21: #{dil_conv_forward.1} parent=5 // pred_check
        %p194 = pneg %p193
      $region22: #{dil_conv_forward.1} parent=5 // pred_check_branch
        %196 = sbr.rel (%p194) target = $region24
      $region23: #{dil_conv_forward.1} parent=5 // pred_region
        // Predicated region
        $region25: #{dil_conv_forward.1} parent=23 // pred_check
          %p197 = pneg %p46
        $region26: #{dil_conv_forward.1} parent=23 // pred_check_branch
          %199 = sbr.rel (%p197) target = $region28
        $region27: #{dil_conv_forward.1} parent=23 // pred_region
          %s200 = smul.u32 2, %s21
          %p201 = scmp.lt.s32.totalorder %s200, 3
          %s202 = scalar_select %p201, %s200, 3
          %s203 = smul.addr %s202, 2
          %s204 = smul.addr %s203, 8
          %s205 = scalar_lea.vmem %s0, %s204
          %s206 = smul.u32 2, %s21
        $region28: #{dil_conv_forward.1} parent=23 // pred_fallthru
          _
        // Predicated region
        $region29: #{dil_conv_forward.1} parent=23 // pred_check
          %p207 = pneg %p72
        $region30: #{dil_conv_forward.1} parent=23 // pred_check_branch
          %209 = sbr.rel (%p207) target = $region32
        $region31: #{dil_conv_forward.1} parent=23 // pred_region
          %s210 = smul.u32 2, %s21
          %p211 = scmp.lt.s32.totalorder %s210, 3
          %s212 = scalar_select %p211, %s210, 3
          %s213 = smul.addr %s212, 2
          %s214 = smul.addr %s213, 8
          %s215 = scalar_lea.vmem %s1, %s214
          %s216 = smul.u32 2, %s21
        $region32: #{dil_conv_forward.1} parent=23 // pred_fallthru
          _
        // Predicated region
        $region33: #{dil_conv_forward.1} parent=23 // pred_check
          %p217 = pneg %p119
        $region34: #{dil_conv_forward.1} parent=23 // pred_check_branch
          %219 = sbr.rel (%p217) target = $region36
        $region35: #{dil_conv_forward.1} parent=23 // pred_region
          %p220 = scmp.lt.s32.totalorder %s22, 3
          %s221 = scalar_select %p220, %s22, 3
          %s222 = smul.addr %s221, 32
          %s223 = smul.addr %s222, 4
          %s224 = scalar_lea.vmem %s3, %s223
        $region36: #{dil_conv_forward.1} parent=23 // pred_fallthru
          _
      $region24: #{dil_conv_forward.1} parent=5 // pred_fallthru
        _
      %p225 = scmp.le.s32.totalorder 1, %s14
      %p226 = scmp.lt.s32.totalorder %s14, 9
      %p227 = pnand %p225, %p226
      %p228 = pneg %p227
      // Predicated region
      $region37: #{dil_conv_forward.1} parent=5 // pred_check
        _
      $region38: #{dil_conv_forward.1} parent=5 // pred_check_branch
        %230 = sbr.rel (%p227) target = $region40
      $region39: #{dil_conv_forward.1} parent=5 // pred_region
        %s231 = ssub.s32 %s14, 1
        %s232 = smul.u32 2, %s23
        %p233 = scmp.lt.s32.totalorder %s232, 3
        %s234 = scalar_select %p233, %s232, 3
        %s235 = smul.addr %s234, 2
        %s236 = smul.addr %s235, 8
        %s237 = scalar_lea.vmem %s0, %s236
        %p238 = pneg %p52
        %p239 = pneg %p49
        %s240 = smul.u32 2, %s23
        %p241 = scmp.lt.s32.totalorder %s240, 3
        %s242 = scalar_select %p241, %s240, 3
        %s243 = smul.addr %s242, 2
        %s244 = smul.addr %s243, 8
        %s245 = scalar_lea.vmem %s1, %s244
        %p246 = pneg %p78
        %p247 = pneg %p75
        %p248 = pneg %p99
        %p249 = pneg %p96
        %p250 = scmp.lt.s32.totalorder %s24, 3
        %s251 = scalar_select %p250, %s24, 3
        %s252 = smul.addr %s251, 32
        %s253 = smul.addr %s252, 4
        %s254 = scalar_lea.vmem %s3, %s253
        %p255 = pneg %p125
        %p256 = pneg %p122
        %p257 = pneg %p146
        %p258 = pneg %p143
        %p259 = pneg %p172
        %p260 = pneg %p169
        %s261 = sand.u32 %s159, 1
        %s262 = scalar_lea.sflag [#allocation5], %s261
        %s263 = sand.u32 %s159, 1
        %s264 = smul.addr %s263, 32
        %s265 = scalar_lea.vmem [#allocation4], %s264
        %s266 = smul.u32 2, %s23
        %p267 = scmp.lt.s32.totalorder %s266, 3
        %s268 = scalar_select %p267, %s266, 3
        %s269 = smul.addr %s268, 2
        %s270 = smul.addr %s269, 8
        %s271 = scalar_lea.vmem %s0, %s270
        %s272 = smul.u32 2, %s23
        %s273 = smul.u32 2, %s23
        %p274 = scmp.lt.s32.totalorder %s273, 3
        %s275 = scalar_select %p274, %s273, 3
        %s276 = smul.addr %s275, 2
        %s277 = smul.addr %s276, 8
        %s278 = scalar_lea.vmem %s1, %s277
        %s279 = smul.u32 2, %s23
        %p280 = scmp.lt.s32.totalorder %s24, 3
        %s281 = scalar_select %p280, %s24, 3
        %s282 = smul.addr %s281, 32
        %s283 = smul.addr %s282, 4
        %s284 = scalar_lea.vmem %s3, %s283
        %s285 = smul.u32 2, %s23
        %v287 = vld [vmem:[%s2] sm:$0x1]
        %v288 = vld [vmem:[%s2 + $0x1] sm:$0x1]
        %v289 = vld [vmem:[%s2 + $0x2] sm:$0x1]
        %v290 = vld [vmem:[%s2 + $0x3] sm:$0x1]
        %p291 = scmp.eq.s32.totalorder %s24, 0
        // Predicated region
        $region41: #{dil_conv_forward.1} parent=39 // pred_check
          %p292 = pneg %p291
        $region42: #{dil_conv_forward.1} parent=39 // pred_check_branch
          %294 = sbr.rel (%p292) target = $region44
        $region43: #{dil_conv_forward.1} parent=39 // pred_region
          %v295 = vld [vmem:[%s271] sm:$0xff]
          %v296 = vld [vmem:[%s271 + $0x8] sm:$0xff]
          %v297 = vld [vmem:[%s271 + $0x10] sm:$0xff]
          %v298 = vld [vmem:[%s271 + $0x18] sm:$0xff]
          %299 = vadd.xlane.f32.xlu0 %v295
          %v300 = vpop.xlane.xlu0 %299
          %301 = vadd.xlane.f32.xlu0 %v296
          %v302 = vpop.xlane.xlu0 %301
          %303 = vadd.xlane.f32.xlu0 %v297
          %v304 = vpop.xlane.xlu0 %303
          %305 = vadd.xlane.f32.xlu0 %v298
          %v306 = vpop.xlane.xlu0 %305
          %v307 = vrcp.pop 128.0
          %v308 = vmul.f32 %v300, %v307
          %v309 = vmul.f32 %v302, %v307
          %v310 = vmul.f32 %v304, %v307
          %v311 = vmul.f32 %v306, %v307
          %v312 = vsub.f32 %v295, %v308
          %v313 = vsub.f32 %v296, %v309
          %v314 = vsub.f32 %v297, %v310
          %v315 = vsub.f32 %v298, %v311
          %v316 = vmul.f32 %v312, %v312
          %v317 = vmul.f32 %v313, %v313
          %v318 = vmul.f32 %v314, %v314
          %v319 = vmul.f32 %v315, %v315
          %320 = vadd.xlane.f32.xlu0 %v316
          %v321 = vpop.xlane.xlu0 %320
          %322 = vadd.xlane.f32.xlu0 %v317
          %v323 = vpop.xlane.xlu0 %322
          %324 = vadd.xlane.f32.xlu0 %v318
          %v325 = vpop.xlane.xlu0 %324
          %326 = vadd.xlane.f32.xlu0 %v319
          %v327 = vpop.xlane.xlu0 %326
          %v328 = vmul.f32 %v321, %v307
          %v329 = vmul.f32 %v323, %v307
          %v330 = vmul.f32 %v325, %v307
          %v331 = vmul.f32 %v327, %v307
          %v332 = vadd.f32 %v328, 1e-05
          %v333 = vadd.f32 %v329, 1e-05
          %v334 = vadd.f32 %v330, 1e-05
          %v335 = vadd.f32 %v331, 1e-05
          %v336 = vrsqrt.pop %v332
          %v337 = vrsqrt.pop %v333
          %v338 = vrsqrt.pop %v334
          %v339 = vrsqrt.pop %v335
          %v340 = vmul.f32 %v312, %v336
          %v341 = vmul.f32 %v313, %v337
          %v342 = vmul.f32 %v314, %v338
          %v343 = vmul.f32 %v315, %v339
          %v344 = vlaneseq
          %v345 = vshrl.u32 %v344, 7
          %v346 = vsub.s32 0, %v345
          %v347 = vrot.slane %v287, %v346
          %v348 = vmul.f32 %v340, %v347
          %v349 = vmul.f32 %v341, %v347
          %v350 = vmul.f32 %v342, %v347
          %v351 = vmul.f32 %v343, %v347
          %v352 = vlaneseq
          %v353 = vshrl.u32 %v352, 7
          %v354 = vsub.s32 0, %v353
          %v355 = vrot.slane %v288, %v354
          %v356 = vadd.f32 %v348, %v355
          %v357 = vadd.f32 %v349, %v355
          %v358 = vadd.f32 %v350, %v355
          %v359 = vadd.f32 %v351, %v355
          %360 = vst [vmem:[#allocation2] sm:$0xff] %v356
          %361 = vst [vmem:[#allocation2 + $0x8] sm:$0xff] %v357
          %362 = vst [vmem:[#allocation2 + $0x10] sm:$0xff] %v358
          %363 = vst [vmem:[#allocation2 + $0x18] sm:$0xff] %v359
          %v364 = vld [vmem:[%s278] sm:$0xff]
          %v365 = vld [vmem:[%s278 + $0x8] sm:$0xff]
          %v366 = vld [vmem:[%s278 + $0x10] sm:$0xff]
          %v367 = vld [vmem:[%s278 + $0x18] sm:$0xff]
          %v368 = vld [vmem:[%s4] sm:$0x1]
          %370 = vset.pattern.permute.xlu0 0
          %371 = vperm.xlu0 %370, %v364
          %v372 = vpop.permute.xlu0 %371
          %375 = vset.pattern.permute.xlu0 0
          %376 = vperm.xlu0 %375, %v365
          %v377 = vpop.permute.xlu0 %376
          %380 = vset.pattern.permute.xlu0 0
          %381 = vperm.xlu0 %380, %v366
          %v382 = vpop.permute.xlu0 %381
          %385 = vset.pattern.permute.xlu0 0
          %386 = vperm.xlu0 %385, %v367
          %v387 = vpop.permute.xlu0 %386
          %v389 = vlaneseq
          %v390 = vshrl.u32 %v389, 7
          %v391 = vsub.s32 0, %v390
          %v392 = vrot.slane %v368, %v391
          %v393 = vmul.f32 %v372, %v392
          %v394 = vmul.f32 %v377, %v392
          %v395 = vmul.f32 %v382, %v392
          %v396 = vmul.f32 %v387, %v392
          %v397 = vld [vmem:[%s4 + $0x1] sm:$0x1]
          %398 = vset.pattern.permute.xlu0 1
          %399 = vperm.xlu0 %398, %v364
          %v400 = vpop.permute.xlu0 %399
          %402 = vset.pattern.permute.xlu0 1
          %403 = vperm.xlu0 %402, %v365
          %v404 = vpop.permute.xlu0 %403
          %406 = vset.pattern.permute.xlu0 1
          %407 = vperm.xlu0 %406, %v366
          %v408 = vpop.permute.xlu0 %407
          %410 = vset.pattern.permute.xlu0 1
          %411 = vperm.xlu0 %410, %v367
          %v412 = vpop.permute.xlu0 %411
          %v414 = vlaneseq
          %v415 = vshrl.u32 %v414, 7
          %v416 = vsub.s32 0, %v415
          %v417 = vrot.slane %v397, %v416
          %v418 = vmul.f32 %v400, %v417
          %v419 = vmul.f32 %v404, %v417
          %v420 = vmul.f32 %v408, %v417
          %v421 = vmul.f32 %v412, %v417
          %v422 = vadd.f32 %v393, %v418
          %v423 = vadd.f32 %v394, %v419
          %v424 = vadd.f32 %v395, %v420
          %v425 = vadd.f32 %v396, %v421
          %v426 = vld [vmem:[%s4 + $0x2] sm:$0x1]
          %427 = vset.pattern.permute.xlu0 2
          %428 = vperm.xlu0 %427, %v364
          %v429 = vpop.permute.xlu0 %428
          %431 = vset.pattern.permute.xlu0 2
          %432 = vperm.xlu0 %431, %v365
          %v433 = vpop.permute.xlu0 %432
          %435 = vset.pattern.permute.xlu0 2
          %436 = vperm.xlu0 %435, %v366
          %v437 = vpop.permute.xlu0 %436
          %439 = vset.pattern.permute.xlu0 2
          %440 = vperm.xlu0 %439, %v367
          %v441 = vpop.permute.xlu0 %440
          %v443 = vlaneseq
          %v444 = vshrl.u32 %v443, 7
          %v445 = vsub.s32 0, %v444
          %v446 = vrot.slane %v426, %v445
          %v447 = vmul.f32 %v429, %v446
          %v448 = vmul.f32 %v433, %v446
          %v449 = vmul.f32 %v437, %v446
          %v450 = vmul.f32 %v441, %v446
          %v451 = vadd.f32 %v422, %v447
          %v452 = vadd.f32 %v423, %v448
          %v453 = vadd.f32 %v424, %v449
          %v454 = vadd.f32 %v425, %v450
          %v455 = vld [vmem:[%s4 + $0x3] sm:$0x1]
          %456 = vset.pattern.permute.xlu0 3
          %457 = vperm.xlu0 %456, %v364
          %v458 = vpop.permute.xlu0 %457
          %460 = vset.pattern.permute.xlu0 3
          %461 = vperm.xlu0 %460, %v365
          %v462 = vpop.permute.xlu0 %461
          %464 = vset.pattern.permute.xlu0 3
          %465 = vperm.xlu0 %464, %v366
          %v466 = vpop.permute.xlu0 %465
          %468 = vset.pattern.permute.xlu0 3
          %469 = vperm.xlu0 %468, %v367
          %v470 = vpop.permute.xlu0 %469
          %v472 = vlaneseq
          %v473 = vshrl.u32 %v472, 7
          %v474 = vsub.s32 0, %v473
          %v475 = vrot.slane %v455, %v474
          %v476 = vmul.f32 %v458, %v475
          %v477 = vmul.f32 %v462, %v475
          %v478 = vmul.f32 %v466, %v475
          %v479 = vmul.f32 %v470, %v475
          %v480 = vadd.f32 %v451, %v476
          %v481 = vadd.f32 %v452, %v477
          %v482 = vadd.f32 %v453, %v478
          %v483 = vadd.f32 %v454, %v479
          %484 = vst [vmem:[#allocation3] sm:$0xff] %v480
          %485 = vst [vmem:[#allocation3 + $0x8] sm:$0xff] %v481
          %486 = vst [vmem:[#allocation3 + $0x10] sm:$0xff] %v482
          %487 = vst [vmem:[#allocation3 + $0x18] sm:$0xff] %v483
        $region44: #{dil_conv_forward.1} parent=39 // pred_fallthru
          _
        %v488 = vlaneseq
        %v489 = vshrl.u32 %v488, 7
        %v490 = vadd.s32 %v489, 8
        %v491 = vld [vmem:[#allocation2] sm:$0xff]
        %v492 = vld [vmem:[#allocation2 + $0x8] sm:$0xff]
        %v493 = vld [vmem:[#allocation2 + $0x10] sm:$0xff]
        %v494 = vld [vmem:[#allocation2 + $0x18] sm:$0xff]
        // Predicated region
        $region45: #{dil_conv_forward.1} parent=39 // pred_check
          %p495 = pneg %p291
        $region46: #{dil_conv_forward.1} parent=39 // pred_check_branch
          %497 = sbr.rel (%p495) target = $region48
        $region47: #{dil_conv_forward.1} parent=39 // pred_region
          %v498 = vld [vmem:[%s278] sm:$0xff]
          %v499 = vld [vmem:[%s278 + $0x8] sm:$0xff]
          %v500 = vld [vmem:[%s278 + $0x10] sm:$0xff]
          %v501 = vld [vmem:[%s278 + $0x18] sm:$0xff]
          %vm502 = vcmp.ge.s32.totalorder %v489, 1
          %vm503 = vcmp.ge.s32.totalorder %v490, 1
          %v504 = vrot.slane %v491, 7
          %v505 = vrot.slane %v492, 7
          %v506 = vrot.slane %v493, 7
          %v507 = vrot.slane %v494, 7
          %vm508 = vcmp.lt.s32.totalorder %v489, 1
          %v509 = vsel %vm508, %v506, %v507
          %v510 = vsel %vm508, %v505, %v506
          %v511 = vsel %vm508, %v504, %v505
          %v512 = vsel %vm508, %v507, %v504
          %v513 = vsel %vm502, 1, 0
          %v514 = vsel %vm503, 1, 0
          %vm515 = vcmp.eq.s32.totalorder %v513, 1
          %vm516 = vcmp.eq.s32.totalorder %v514, 1
          %v517 = vsel %vm515, %v512, 0.0
          %v518 = vsel %vm516, %v511, 0.0
          %v519 = vsel %vm515, %v510, 0.0
          %v520 = vsel %vm516, %v509, 0.0
          %vm521 = vcmp.lt.s32.totalorder %v489, 15
          %vm522 = vcmp.lt.s32.totalorder %v490, 15
          %v523 = vrot.slane %v491, 1
          %v524 = vrot.slane %v492, 1
          %v525 = vrot.slane %v493, 1
          %v526 = vrot.slane %v494, 1
          %vm527 = vcmp.lt.s32.totalorder %v489, 7
          %v528 = vsel %vm527, %v525, %v526
          %v529 = vsel %vm527, %v524, %v525
          %v530 = vsel %vm527, %v523, %v524
          %v531 = vsel %vm527, %v526, %v523
          %v532 = vsel %vm521, 1, 0
          %v533 = vsel %vm522, 1, 0
          %vm534 = vcmp.eq.s32.totalorder %v532, 1
          %vm535 = vcmp.eq.s32.totalorder %v533, 1
          %v536 = vsel %vm534, %v530, 0.0
          %v537 = vsel %vm535, %v529, 0.0
          %v538 = vsel %vm534, %v528, 0.0
          %v539 = vsel %vm535, %v531, 0.0
          %541 = vset.pattern.permute.xlu0 0
          %542 = vperm.xlu0 %541, %v498
          %v543 = vpop.permute.xlu0 %542
          %546 = vset.pattern.permute.xlu0 0
          %547 = vperm.xlu0 %546, %v499
          %v548 = vpop.permute.xlu0 %547
          %551 = vset.pattern.permute.xlu0 0
          %552 = vperm.xlu0 %551, %v500
          %v553 = vpop.permute.xlu0 %552
          %556 = vset.pattern.permute.xlu0 0
          %557 = vperm.xlu0 %556, %v501
          %v558 = vpop.permute.xlu0 %557
          %v560 = vmul.f32 %v517, %v543
          %v561 = vmul.f32 %v518, %v548
          %v562 = vmul.f32 %v519, %v553
          %v563 = vmul.f32 %v520, %v558
          %v564 = vmul.f32 %v536, %v543
          %v565 = vmul.f32 %v537, %v548
          %v566 = vmul.f32 %v538, %v553
          %v567 = vmul.f32 %v539, %v558
          %v568 = vpack.c.bf16 %v561, %v560
          %v569 = vpack.c.bf16 %v565, %v564
          %v570 = vpack.c.bf16 %v563, %v562
          %v571 = vpack.c.bf16 %v567, %v566
          %v572 = vld [vmem:[#allocation3] sm:$0xff]
          %v573 = vld [vmem:[#allocation3 + $0x8] sm:$0xff]
          %v574 = vld [vmem:[#allocation3 + $0x10] sm:$0xff]
          %v575 = vld [vmem:[#allocation3 + $0x18] sm:$0xff]
          %v576 = vld [vmem:[%s284] sm:$0xf]
          %v577 = vld [vmem:[%s284 + $0x4] sm:$0xf]
          %v578 = vld [vmem:[%s284 + $0x8] sm:$0xf]
          %v579 = vld [vmem:[%s284 + $0xc] sm:$0xf]
          %v580 = vld [vmem:[%s284 + $0x10] sm:$0xf]
          %v581 = vld [vmem:[%s284 + $0x14] sm:$0xf]
          %v582 = vld [vmem:[%s284 + $0x18] sm:$0xf]
          %v583 = vld [vmem:[%s284 + $0x1c] sm:$0xf]
          %v584 = vld [vmem:[%s284 + $0x20] sm:$0xf]
          %v585 = vld [vmem:[%s284 + $0x24] sm:$0xf]
          %v586 = vld [vmem:[%s284 + $0x28] sm:$0xf]
          %v587 = vld [vmem:[%s284 + $0x2c] sm:$0xf]
          %v588 = vld [vmem:[%s284 + $0x30] sm:$0xf]
          %v589 = vld [vmem:[%s284 + $0x34] sm:$0xf]
          %v590 = vld [vmem:[%s284 + $0x38] sm:$0xf]
          %v591 = vld [vmem:[%s284 + $0x3c] sm:$0xf]
          %v592 = vld [vmem:[%s284 + $0x40] sm:$0xf]
          %v593 = vld [vmem:[%s284 + $0x44] sm:$0xf]
          %v594 = vld [vmem:[%s284 + $0x48] sm:$0xf]
          %v595 = vld [vmem:[%s284 + $0x4c] sm:$0xf]
          %v596 = vld [vmem:[%s284 + $0x50] sm:$0xf]
          %v597 = vld [vmem:[%s284 + $0x54] sm:$0xf]
          %v598 = vld [vmem:[%s284 + $0x58] sm:$0xf]
          %v599 = vld [vmem:[%s284 + $0x5c] sm:$0xf]
          %v600 = vld [vmem:[%s284 + $0x60] sm:$0xf]
          %v601 = vld [vmem:[%s284 + $0x64] sm:$0xf]
          %v602 = vld [vmem:[%s284 + $0x68] sm:$0xf]
          %v603 = vld [vmem:[%s284 + $0x6c] sm:$0xf]
          %v604 = vld [vmem:[%s284 + $0x70] sm:$0xf]
          %v605 = vld [vmem:[%s284 + $0x74] sm:$0xf]
          %v606 = vld [vmem:[%s284 + $0x78] sm:$0xf]
          %v607 = vld [vmem:[%s284 + $0x7c] sm:$0xf]
          %v640 = vunpack.c.l.b16 %v576
          %v641 = vunpack.c.l.b16 %v577
          %v642 = vunpack.c.l.b16 %v578
          %v643 = vunpack.c.l.b16 %v579
          %v644 = vunpack.c.l.b16 %v580
          %v645 = vunpack.c.l.b16 %v581
          %v646 = vunpack.c.l.b16 %v582
          %v647 = vunpack.c.l.b16 %v583
          %v648 = vunpack.c.l.b16 %v584
          %v649 = vunpack.c.l.b16 %v585
          %v650 = vunpack.c.l.b16 %v586
          %v651 = vunpack.c.l.b16 %v587
          %v652 = vunpack.c.l.b16 %v588
          %v653 = vunpack.c.l.b16 %v589
          %v654 = vunpack.c.l.b16 %v590
          %v655 = vunpack.c.l.b16 %v591
          %v656 = vunpack.c.l.b16 %v592
          %v657 = vunpack.c.l.b16 %v593
          %v658 = vunpack.c.l.b16 %v594
          %v659 = vunpack.c.l.b16 %v595
          %v660 = vunpack.c.l.b16 %v596
          %v661 = vunpack.c.l.b16 %v597
          %v662 = vunpack.c.l.b16 %v598
          %v663 = vunpack.c.l.b16 %v599
          %v664 = vunpack.c.l.b16 %v600
          %v665 = vunpack.c.l.b16 %v601
          %v666 = vunpack.c.l.b16 %v602
          %v667 = vunpack.c.l.b16 %v603
          %v668 = vunpack.c.l.b16 %v604
          %v669 = vunpack.c.l.b16 %v605
          %v670 = vunpack.c.l.b16 %v606
          %v671 = vunpack.c.l.b16 %v607
          %v672 = vpack.c.b16 %v641, %v640
          %v673 = vpack.c.b16 %v643, %v642
          %v674 = vpack.c.b16 %v645, %v644
          %v675 = vpack.c.b16 %v647, %v646
          %v676 = vpack.c.b16 %v649, %v648
          %v677 = vpack.c.b16 %v651, %v650
          %v678 = vpack.c.b16 %v653, %v652
          %v679 = vpack.c.b16 %v655, %v654
          %v680 = vpack.c.b16 %v657, %v656
          %v681 = vpack.c.b16 %v659, %v658
          %v682 = vpack.c.b16 %v661, %v660
          %v683 = vpack.c.b16 %v663, %v662
          %v684 = vpack.c.b16 %v665, %v664
          %v685 = vpack.c.b16 %v667, %v666
          %v686 = vpack.c.b16 %v669, %v668
          %v687 = vpack.c.b16 %v671, %v670
          %704 = vmatprep.subr.bf16.mxu0 0
          %705 = vmatpush1.bf16.msra.mxu0 %v679
          %706 = vmatprep.subr.bf16.mxu0 0
          %707 = vmatpush1.bf16.msra.mxu0 %v678
          %708 = vmatprep.subr.bf16.mxu0 0
          %709 = vmatpush1.bf16.msra.mxu0 %v677
          %710 = vmatprep.subr.bf16.mxu0 0
          %711 = vmatpush1.bf16.msra.mxu0 %v676
          %712 = vmatprep.subr.bf16.mxu0 0
          %713 = vmatpush1.bf16.msra.mxu0 %v675
          %714 = vmatprep.subr.bf16.mxu0 0
          %715 = vmatpush1.bf16.msra.mxu0 %v674
          %716 = vmatprep.subr.bf16.mxu0 0
          %717 = vmatpush1.bf16.msra.mxu0 %v673
          %718 = vmatprep.subr.bf16.mxu0 0
          %719 = vmatpush1.bf16.msra.mxu0 %v672
          %720 = vmatprep.subr.bf16.mxu0 0
          %721 = vmatpush2.bf16.msra.mxu0 %v687
          %722 = vmatprep.subr.bf16.mxu0 0
          %723 = vmatpush2.bf16.msra.mxu0 %v686
          %724 = vmatprep.subr.bf16.mxu0 0
          %725 = vmatpush2.bf16.msra.mxu0 %v685
          %726 = vmatprep.subr.bf16.mxu0 0
          %727 = vmatpush2.bf16.msra.mxu0 %v684
          %728 = vmatprep.subr.bf16.mxu0 0
          %729 = vmatpush2.bf16.msra.mxu0 %v683
          %730 = vmatprep.subr.bf16.mxu0 0
          %731 = vmatpush2.bf16.msra.mxu0 %v682
          %732 = vmatprep.subr.bf16.mxu0 0
          %733 = vmatpush2.bf16.msra.mxu0 %v681
          %734 = vmatprep.subr.bf16.mxu0 0
          %735 = vmatpush2.bf16.msra.mxu0 %v680
          %736 = vmatprep.mubr.bf16.mxu0 %v569
          %737 = vmatmul.mubr.bf16.gmra.mxu0 %v568
          %v738 = vpop.f32.mrf.mxu0
          %v739 = vadd.f32 0.0, %v738
          %v740 = vpop.f32.mrf.mxu0
          %v741 = vpop.f32.mrf.mxu0
          %v742 = vadd.f32 0.0, %v741
          %v743 = vpop.f32.mrf.mxu0
          %744 = vmatprep.mubr.bf16.mxu0 %v571
          %745 = vmatmul.mubr.bf16.gmra.mxu0 %v570
          %v746 = vpop.f32.mrf.mxu0
          %v747 = vadd.f32 0.0, %v746
          %v748 = vpop.f32.mrf.mxu0
          %v749 = vpop.f32.mrf.mxu0
          %v750 = vadd.f32 0.0, %v749
          %v751 = vpop.f32.mrf.mxu0
          %752 = vdwg.mxu0
          %v753 = vadd.f32 %v572, %v739
          %v754 = vadd.f32 %v573, %v742
          %v755 = vadd.f32 %v574, %v747
          %v756 = vadd.f32 %v575, %v750
          %757 = vst [vmem:[#allocation3] sm:$0xff] %v753
          %758 = vst [vmem:[#allocation3 + $0x8] sm:$0xff] %v754
          %759 = vst [vmem:[#allocation3 + $0x10] sm:$0xff] %v755
          %760 = vst [vmem:[#allocation3 + $0x18] sm:$0xff] %v756
        $region48: #{dil_conv_forward.1} parent=39 // pred_fallthru
          _
        %p761 = scmp.eq.s32.totalorder %s24, 1
        // Predicated region
        $region49: #{dil_conv_forward.1} parent=39 // pred_check
          %p762 = pneg %p761
        $region50: #{dil_conv_forward.1} parent=39 // pred_check_branch
          %764 = sbr.rel (%p762) target = $region52
        $region51: #{dil_conv_forward.1} parent=39 // pred_region
          %v765 = vld [vmem:[%s278] sm:$0xff]
          %v766 = vld [vmem:[%s278 + $0x8] sm:$0xff]
          %v767 = vld [vmem:[%s278 + $0x10] sm:$0xff]
          %v768 = vld [vmem:[%s278 + $0x18] sm:$0xff]
          %vm769 = vcmp.ge.s32.totalorder %v489, 2
          %vm770 = vcmp.ge.s32.totalorder %v490, 2
          %v771 = vrot.slane %v491, 6
          %v772 = vrot.slane %v492, 6
          %v773 = vrot.slane %v493, 6
          %v774 = vrot.slane %v494, 6
          %vm775 = vcmp.lt.s32.totalorder %v489, 2
          %v776 = vsel %vm775, %v773, %v774
          %v777 = vsel %vm775, %v772, %v773
          %v778 = vsel %vm775, %v771, %v772
          %v779 = vsel %vm775, %v774, %v771
          %v780 = vsel %vm769, 1, 0
          %v781 = vsel %vm770, 1, 0
          %vm782 = vcmp.eq.s32.totalorder %v780, 1
          %vm783 = vcmp.eq.s32.totalorder %v781, 1
          %v784 = vsel %vm782, %v779, 0.0
          %v785 = vsel %vm783, %v778, 0.0
          %v786 = vsel %vm782, %v777, 0.0
          %v787 = vsel %vm783, %v776, 0.0
          %vm788 = vcmp.lt.s32.totalorder %v489, 14
          %vm789 = vcmp.lt.s32.totalorder %v490, 14
          %v790 = vrot.slane %v491, 2
          %v791 = vrot.slane %v492, 2
          %v792 = vrot.slane %v493, 2
          %v793 = vrot.slane %v494, 2
          %vm794 = vcmp.lt.s32.totalorder %v489, 6
          %v795 = vsel %vm794, %v792, %v793
          %v796 = vsel %vm794, %v791, %v792
          %v797 = vsel %vm794, %v790, %v791
          %v798 = vsel %vm794, %v793, %v790
          %v799 = vsel %vm788, 1, 0
          %v800 = vsel %vm789, 1, 0
          %vm801 = vcmp.eq.s32.totalorder %v799, 1
          %vm802 = vcmp.eq.s32.totalorder %v800, 1
          %v803 = vsel %vm801, %v797, 0.0
          %v804 = vsel %vm802, %v796, 0.0
          %v805 = vsel %vm801, %v795, 0.0
          %v806 = vsel %vm802, %v798, 0.0
          %808 = vset.pattern.permute.xlu0 1
          %809 = vperm.xlu0 %808, %v765
          %v810 = vpop.permute.xlu0 %809
          %813 = vset.pattern.permute.xlu0 1
          %814 = vperm.xlu0 %813, %v766
          %v815 = vpop.permute.xlu0 %814
          %818 = vset.pattern.permute.xlu0 1
          %819 = vperm.xlu0 %818, %v767
          %v820 = vpop.permute.xlu0 %819
          %823 = vset.pattern.permute.xlu0 1
          %824 = vperm.xlu0 %823, %v768
          %v825 = vpop.permute.xlu0 %824
          %v827 = vmul.f32 %v784, %v810
          %v828 = vmul.f32 %v785, %v815
          %v829 = vmul.f32 %v786, %v820
          %v830 = vmul.f32 %v787, %v825
          %v831 = vmul.f32 %v803, %v810
          %v832 = vmul.f32 %v804, %v815
          %v833 = vmul.f32 %v805, %v820
          %v834 = vmul.f32 %v806, %v825
          %v835 = vpack.c.bf16 %v828, %v827
          %v836 = vpack.c.bf16 %v832, %v831
          %v837 = vpack.c.bf16 %v830, %v829
          %v838 = vpack.c.bf16 %v834, %v833
          %v839 = vld [vmem:[#allocation3] sm:$0xff]
          %v840 = vld [vmem:[#allocation3 + $0x8] sm:$0xff]
          %v841 = vld [vmem:[#allocation3 + $0x10] sm:$0xff]
          %v842 = vld [vmem:[#allocation3 + $0x18] sm:$0xff]
          %v843 = vld [vmem:[%s284] sm:$0xf]
          %v844 = vld [vmem:[%s284 + $0x4] sm:$0xf]
          %v845 = vld [vmem:[%s284 + $0x8] sm:$0xf]
          %v846 = vld [vmem:[%s284 + $0xc] sm:$0xf]
          %v847 = vld [vmem:[%s284 + $0x10] sm:$0xf]
          %v848 = vld [vmem:[%s284 + $0x14] sm:$0xf]
          %v849 = vld [vmem:[%s284 + $0x18] sm:$0xf]
          %v850 = vld [vmem:[%s284 + $0x1c] sm:$0xf]
          %v851 = vld [vmem:[%s284 + $0x20] sm:$0xf]
          %v852 = vld [vmem:[%s284 + $0x24] sm:$0xf]
          %v853 = vld [vmem:[%s284 + $0x28] sm:$0xf]
          %v854 = vld [vmem:[%s284 + $0x2c] sm:$0xf]
          %v855 = vld [vmem:[%s284 + $0x30] sm:$0xf]
          %v856 = vld [vmem:[%s284 + $0x34] sm:$0xf]
          %v857 = vld [vmem:[%s284 + $0x38] sm:$0xf]
          %v858 = vld [vmem:[%s284 + $0x3c] sm:$0xf]
          %v859 = vld [vmem:[%s284 + $0x40] sm:$0xf]
          %v860 = vld [vmem:[%s284 + $0x44] sm:$0xf]
          %v861 = vld [vmem:[%s284 + $0x48] sm:$0xf]
          %v862 = vld [vmem:[%s284 + $0x4c] sm:$0xf]
          %v863 = vld [vmem:[%s284 + $0x50] sm:$0xf]
          %v864 = vld [vmem:[%s284 + $0x54] sm:$0xf]
          %v865 = vld [vmem:[%s284 + $0x58] sm:$0xf]
          %v866 = vld [vmem:[%s284 + $0x5c] sm:$0xf]
          %v867 = vld [vmem:[%s284 + $0x60] sm:$0xf]
          %v868 = vld [vmem:[%s284 + $0x64] sm:$0xf]
          %v869 = vld [vmem:[%s284 + $0x68] sm:$0xf]
          %v870 = vld [vmem:[%s284 + $0x6c] sm:$0xf]
          %v871 = vld [vmem:[%s284 + $0x70] sm:$0xf]
          %v872 = vld [vmem:[%s284 + $0x74] sm:$0xf]
          %v873 = vld [vmem:[%s284 + $0x78] sm:$0xf]
          %v874 = vld [vmem:[%s284 + $0x7c] sm:$0xf]
          %v907 = vunpack.c.l.b16 %v843
          %v908 = vunpack.c.l.b16 %v844
          %v909 = vunpack.c.l.b16 %v845
          %v910 = vunpack.c.l.b16 %v846
          %v911 = vunpack.c.l.b16 %v847
          %v912 = vunpack.c.l.b16 %v848
          %v913 = vunpack.c.l.b16 %v849
          %v914 = vunpack.c.l.b16 %v850
          %v915 = vunpack.c.l.b16 %v851
          %v916 = vunpack.c.l.b16 %v852
          %v917 = vunpack.c.l.b16 %v853
          %v918 = vunpack.c.l.b16 %v854
          %v919 = vunpack.c.l.b16 %v855
          %v920 = vunpack.c.l.b16 %v856
          %v921 = vunpack.c.l.b16 %v857
          %v922 = vunpack.c.l.b16 %v858
          %v923 = vunpack.c.l.b16 %v859
          %v924 = vunpack.c.l.b16 %v860
          %v925 = vunpack.c.l.b16 %v861
          %v926 = vunpack.c.l.b16 %v862
          %v927 = vunpack.c.l.b16 %v863
          %v928 = vunpack.c.l.b16 %v864
          %v929 = vunpack.c.l.b16 %v865
          %v930 = vunpack.c.l.b16 %v866
          %v931 = vunpack.c.l.b16 %v867
          %v932 = vunpack.c.l.b16 %v868
          %v933 = vunpack.c.l.b16 %v869
          %v934 = vunpack.c.l.b16 %v870
          %v935 = vunpack.c.l.b16 %v871
          %v936 = vunpack.c.l.b16 %v872
          %v937 = vunpack.c.l.b16 %v873
          %v938 = vunpack.c.l.b16 %v874
          %v939 = vpack.c.b16 %v908, %v907
          %v940 = vpack.c.b16 %v910, %v909
          %v941 = vpack.c.b16 %v912, %v911
          %v942 = vpack.c.b16 %v914, %v913
          %v943 = vpack.c.b16 %v916, %v915
          %v944 = vpack.c.b16 %v918, %v917
          %v945 = vpack.c.b16 %v920, %v919
          %v946 = vpack.c.b16 %v922, %v921
          %v947 = vpack.c.b16 %v924, %v923
          %v948 = vpack.c.b16 %v926, %v925
          %v949 = vpack.c.b16 %v928, %v927
          %v950 = vpack.c.b16 %v930, %v929
          %v951 = vpack.c.b16 %v932, %v931
          %v952 = vpack.c.b16 %v934, %v933
          %v953 = vpack.c.b16 %v936, %v935
          %v954 = vpack.c.b16 %v938, %v937
          %971 = vmatprep.subr.bf16.mxu0 0
          %972 = vmatpush1.bf16.msra.mxu0 %v946
          %973 = vmatprep.subr.bf16.mxu0 0
          %974 = vmatpush1.bf16.msra.mxu0 %v945
          %975 = vmatprep.subr.bf16.mxu0 0
          %976 = vmatpush1.bf16.msra.mxu0 %v944
          %977 = vmatprep.subr.bf16.mxu0 0
          %978 = vmatpush1.bf16.msra.mxu0 %v943
          %979 = vmatprep.subr.bf16.mxu0 0
          %980 = vmatpush1.bf16.msra.mxu0 %v942
          %981 = vmatprep.subr.bf16.mxu0 0
          %982 = vmatpush1.bf16.msra.mxu0 %v941
          %983 = vmatprep.subr.bf16.mxu0 0
          %984 = vmatpush1.bf16.msra.mxu0 %v940
          %985 = vmatprep.subr.bf16.mxu0 0
          %986 = vmatpush1.bf16.msra.mxu0 %v939
          %987 = vmatprep.subr.bf16.mxu0 0
          %988 = vmatpush2.bf16.msra.mxu0 %v954
          %989 = vmatprep.subr.bf16.mxu0 0
          %990 = vmatpush2.bf16.msra.mxu0 %v953
          %991 = vmatprep.subr.bf16.mxu0 0
          %992 = vmatpush2.bf16.msra.mxu0 %v952
          %993 = vmatprep.subr.bf16.mxu0 0
          %994 = vmatpush2.bf16.msra.mxu0 %v951
          %995 = vmatprep.subr.bf16.mxu0 0
          %996 = vmatpush2.bf16.msra.mxu0 %v950
          %997 = vmatprep.subr.bf16.mxu0 0
          %998 = vmatpush2.bf16.msra.mxu0 %v949
          %999 = vmatprep.subr.bf16.mxu0 0
          %1000 = vmatpush2.bf16.msra.mxu0 %v948
          %1001 = vmatprep.subr.bf16.mxu0 0
          %1002 = vmatpush2.bf16.msra.mxu0 %v947
          %1003 = vmatprep.mubr.bf16.mxu0 %v836
          %1004 = vmatmul.mubr.bf16.gmra.mxu0 %v835
          %v1005 = vpop.f32.mrf.mxu0
          %v1006 = vadd.f32 0.0, %v1005
          %v1007 = vpop.f32.mrf.mxu0
          %v1008 = vpop.f32.mrf.mxu0
          %v1009 = vadd.f32 0.0, %v1008
          %v1010 = vpop.f32.mrf.mxu0
          %1011 = vmatprep.mubr.bf16.mxu0 %v838
          %1012 = vmatmul.mubr.bf16.gmra.mxu0 %v837
          %v1013 = vpop.f32.mrf.mxu0
          %v1014 = vadd.f32 0.0, %v1013
          %v1015 = vpop.f32.mrf.mxu0
          %v1016 = vpop.f32.mrf.mxu0
          %v1017 = vadd.f32 0.0, %v1016
          %v1018 = vpop.f32.mrf.mxu0
          %1019 = vdwg.mxu0
          %v1020 = vadd.f32 %v839, %v1006
          %v1021 = vadd.f32 %v840, %v1009
          %v1022 = vadd.f32 %v841, %v1014
          %v1023 = vadd.f32 %v842, %v1017
          %1024 = vst [vmem:[#allocation3] sm:$0xff] %v1020
          %1025 = vst [vmem:[#allocation3 + $0x8] sm:$0xff] %v1021
          %1026 = vst [vmem:[#allocation3 + $0x10] sm:$0xff] %v1022
          %1027 = vst [vmem:[#allocation3 + $0x18] sm:$0xff] %v1023
        $region52: #{dil_conv_forward.1} parent=39 // pred_fallthru
          _
        %p1028 = scmp.eq.s32.totalorder %s24, 2
        // Predicated region
        $region53: #{dil_conv_forward.1} parent=39 // pred_check
          %p1029 = pneg %p1028
        $region54: #{dil_conv_forward.1} parent=39 // pred_check_branch
          %1031 = sbr.rel (%p1029) target = $region56
        $region55: #{dil_conv_forward.1} parent=39 // pred_region
          %v1032 = vld [vmem:[%s278] sm:$0xff]
          %v1033 = vld [vmem:[%s278 + $0x8] sm:$0xff]
          %v1034 = vld [vmem:[%s278 + $0x10] sm:$0xff]
          %v1035 = vld [vmem:[%s278 + $0x18] sm:$0xff]
          %vm1036 = vcmp.ge.s32.totalorder %v489, 4
          %vm1037 = vcmp.ge.s32.totalorder %v490, 4
          %v1038 = vrot.slane %v491, 4
          %v1039 = vrot.slane %v492, 4
          %v1040 = vrot.slane %v493, 4
          %v1041 = vrot.slane %v494, 4
          %vm1042 = vcmp.lt.s32.totalorder %v489, 4
          %v1043 = vsel %vm1042, %v1040, %v1041
          %v1044 = vsel %vm1042, %v1039, %v1040
          %v1045 = vsel %vm1042, %v1038, %v1039
          %v1046 = vsel %vm1042, %v1041, %v1038
          %v1047 = vsel %vm1036, 1, 0
          %v1048 = vsel %vm1037, 1, 0
          %vm1049 = vcmp.eq.s32.totalorder %v1047, 1
          %vm1050 = vcmp.eq.s32.totalorder %v1048, 1
          %v1051 = vsel %vm1049, %v1046, 0.0
          %v1052 = vsel %vm1050, %v1045, 0.0
          %v1053 = vsel %vm1049, %v1044, 0.0
          %v1054 = vsel %vm1050, %v1043, 0.0
          %vm1055 = vcmp.lt.s32.totalorder %v489, 12
          %vm1056 = vcmp.lt.s32.totalorder %v490, 12
          %v1057 = vsel %vm1055, 1, 0
          %v1058 = vsel %vm1056, 1, 0
          %vm1059 = vcmp.eq.s32.totalorder %v1057, 1
          %vm1060 = vcmp.eq.s32.totalorder %v1058, 1
          %v1061 = vsel %vm1059, %v1045, 0.0
          %v1062 = vsel %vm1060, %v1044, 0.0
          %v1063 = vsel %vm1059, %v1043, 0.0
          %v1064 = vsel %vm1060, %v1046, 0.0
          %1066 = vset.pattern.permute.xlu0 2
          %1067 = vperm.xlu0 %1066, %v1032
          %v1068 = vpop.permute.xlu0 %1067
          %1071 = vset.pattern.permute.xlu0 2
          %1072 = vperm.xlu0 %1071, %v1033
          %v1073 = vpop.permute.xlu0 %1072
          %1076 = vset.pattern.permute.xlu0 2
          %1077 = vperm.xlu0 %1076, %v1034
          %v1078 = vpop.permute.xlu0 %1077
          %1081 = vset.pattern.permute.xlu0 2
          %1082 = vperm.xlu0 %1081, %v1035
          %v1083 = vpop.permute.xlu0 %1082
          %v1085 = vmul.f32 %v1051, %v1068
          %v1086 = vmul.f32 %v1052, %v1073
          %v1087 = vmul.f32 %v1053, %v1078
          %v1088 = vmul.f32 %v1054, %v1083
          %v1089 = vmul.f32 %v1061, %v1068
          %v1090 = vmul.f32 %v1062, %v1073
          %v1091 = vmul.f32 %v1063, %v1078
          %v1092 = vmul.f32 %v1064, %v1083
          %v1093 = vpack.c.bf16 %v1086, %v1085
          %v1094 = vpack.c.bf16 %v1090, %v1089
          %v1095 = vpack.c.bf16 %v1088, %v1087
          %v1096 = vpack.c.bf16 %v1092, %v1091
          %v1097 = vld [vmem:[#allocation3] sm:$0xff]
          %v1098 = vld [vmem:[#allocation3 + $0x8] sm:$0xff]
          %v1099 = vld [vmem:[#allocation3 + $0x10] sm:$0xff]
          %v1100 = vld [vmem:[#allocation3 + $0x18] sm:$0xff]
          %v1101 = vld [vmem:[%s284] sm:$0xf]
          %v1102 = vld [vmem:[%s284 + $0x4] sm:$0xf]
          %v1103 = vld [vmem:[%s284 + $0x8] sm:$0xf]
          %v1104 = vld [vmem:[%s284 + $0xc] sm:$0xf]
          %v1105 = vld [vmem:[%s284 + $0x10] sm:$0xf]
          %v1106 = vld [vmem:[%s284 + $0x14] sm:$0xf]
          %v1107 = vld [vmem:[%s284 + $0x18] sm:$0xf]
          %v1108 = vld [vmem:[%s284 + $0x1c] sm:$0xf]
          %v1109 = vld [vmem:[%s284 + $0x20] sm:$0xf]
          %v1110 = vld [vmem:[%s284 + $0x24] sm:$0xf]
          %v1111 = vld [vmem:[%s284 + $0x28] sm:$0xf]
          %v1112 = vld [vmem:[%s284 + $0x2c] sm:$0xf]
          %v1113 = vld [vmem:[%s284 + $0x30] sm:$0xf]
          %v1114 = vld [vmem:[%s284 + $0x34] sm:$0xf]
          %v1115 = vld [vmem:[%s284 + $0x38] sm:$0xf]
          %v1116 = vld [vmem:[%s284 + $0x3c] sm:$0xf]
          %v1117 = vld [vmem:[%s284 + $0x40] sm:$0xf]
          %v1118 = vld [vmem:[%s284 + $0x44] sm:$0xf]
          %v1119 = vld [vmem:[%s284 + $0x48] sm:$0xf]
          %v1120 = vld [vmem:[%s284 + $0x4c] sm:$0xf]
          %v1121 = vld [vmem:[%s284 + $0x50] sm:$0xf]
          %v1122 = vld [vmem:[%s284 + $0x54] sm:$0xf]
          %v1123 = vld [vmem:[%s284 + $0x58] sm:$0xf]
          %v1124 = vld [vmem:[%s284 + $0x5c] sm:$0xf]
          %v1125 = vld [vmem:[%s284 + $0x60] sm:$0xf]
          %v1126 = vld [vmem:[%s284 + $0x64] sm:$0xf]
          %v1127 = vld [vmem:[%s284 + $0x68] sm:$0xf]
          %v1128 = vld [vmem:[%s284 + $0x6c] sm:$0xf]
          %v1129 = vld [vmem:[%s284 + $0x70] sm:$0xf]
          %v1130 = vld [vmem:[%s284 + $0x74] sm:$0xf]
          %v1131 = vld [vmem:[%s284 + $0x78] sm:$0xf]
          %v1132 = vld [vmem:[%s284 + $0x7c] sm:$0xf]
          %v1165 = vunpack.c.l.b16 %v1101
          %v1166 = vunpack.c.l.b16 %v1102
          %v1167 = vunpack.c.l.b16 %v1103
          %v1168 = vunpack.c.l.b16 %v1104
          %v1169 = vunpack.c.l.b16 %v1105
          %v1170 = vunpack.c.l.b16 %v1106
          %v1171 = vunpack.c.l.b16 %v1107
          %v1172 = vunpack.c.l.b16 %v1108
          %v1173 = vunpack.c.l.b16 %v1109
          %v1174 = vunpack.c.l.b16 %v1110
          %v1175 = vunpack.c.l.b16 %v1111
          %v1176 = vunpack.c.l.b16 %v1112
          %v1177 = vunpack.c.l.b16 %v1113
          %v1178 = vunpack.c.l.b16 %v1114
          %v1179 = vunpack.c.l.b16 %v1115
          %v1180 = vunpack.c.l.b16 %v1116
          %v1181 = vunpack.c.l.b16 %v1117
          %v1182 = vunpack.c.l.b16 %v1118
          %v1183 = vunpack.c.l.b16 %v1119
          %v1184 = vunpack.c.l.b16 %v1120
          %v1185 = vunpack.c.l.b16 %v1121
          %v1186 = vunpack.c.l.b16 %v1122
          %v1187 = vunpack.c.l.b16 %v1123
          %v1188 = vunpack.c.l.b16 %v1124
          %v1189 = vunpack.c.l.b16 %v1125
          %v1190 = vunpack.c.l.b16 %v1126
          %v1191 = vunpack.c.l.b16 %v1127
          %v1192 = vunpack.c.l.b16 %v1128
          %v1193 = vunpack.c.l.b16 %v1129
          %v1194 = vunpack.c.l.b16 %v1130
          %v1195 = vunpack.c.l.b16 %v1131
          %v1196 = vunpack.c.l.b16 %v1132
          %v1197 = vpack.c.b16 %v1166, %v1165
          %v1198 = vpack.c.b16 %v1168, %v1167
          %v1199 = vpack.c.b16 %v1170, %v1169
          %v1200 = vpack.c.b16 %v1172, %v1171
          %v1201 = vpack.c.b16 %v1174, %v1173
          %v1202 = vpack.c.b16 %v1176, %v1175
          %v1203 = vpack.c.b16 %v1178, %v1177
          %v1204 = vpack.c.b16 %v1180, %v1179
          %v1205 = vpack.c.b16 %v1182, %v1181
          %v1206 = vpack.c.b16 %v1184, %v1183
          %v1207 = vpack.c.b16 %v1186, %v1185
          %v1208 = vpack.c.b16 %v1188, %v1187
          %v1209 = vpack.c.b16 %v1190, %v1189
          %v1210 = vpack.c.b16 %v1192, %v1191
          %v1211 = vpack.c.b16 %v1194, %v1193
          %v1212 = vpack.c.b16 %v1196, %v1195
          %1229 = vmatprep.subr.bf16.mxu0 0
          %1230 = vmatpush1.bf16.msra.mxu0 %v1204
          %1231 = vmatprep.subr.bf16.mxu0 0
          %1232 = vmatpush1.bf16.msra.mxu0 %v1203
          %1233 = vmatprep.subr.bf16.mxu0 0
          %1234 = vmatpush1.bf16.msra.mxu0 %v1202
          %1235 = vmatprep.subr.bf16.mxu0 0
          %1236 = vmatpush1.bf16.msra.mxu0 %v1201
          %1237 = vmatprep.subr.bf16.mxu0 0
          %1238 = vmatpush1.bf16.msra.mxu0 %v1200
          %1239 = vmatprep.subr.bf16.mxu0 0
          %1240 = vmatpush1.bf16.msra.mxu0 %v1199
          %1241 = vmatprep.subr.bf16.mxu0 0
          %1242 = vmatpush1.bf16.msra.mxu0 %v1198
          %1243 = vmatprep.subr.bf16.mxu0 0
          %1244 = vmatpush1.bf16.msra.mxu0 %v1197
          %1245 = vmatprep.subr.bf16.mxu0 0
          %1246 = vmatpush2.bf16.msra.mxu0 %v1212
          %1247 = vmatprep.subr.bf16.mxu0 0
          %1248 = vmatpush2.bf16.msra.mxu0 %v1211
          %1249 = vmatprep.subr.bf16.mxu0 0
          %1250 = vmatpush2.bf16.msra.mxu0 %v1210
          %1251 = vmatprep.subr.bf16.mxu0 0
          %1252 = vmatpush2.bf16.msra.mxu0 %v1209
          %1253 = vmatprep.subr.bf16.mxu0 0
          %1254 = vmatpush2.bf16.msra.mxu0 %v1208
          %1255 = vmatprep.subr.bf16.mxu0 0
          %1256 = vmatpush2.bf16.msra.mxu0 %v1207
          %1257 = vmatprep.subr.bf16.mxu0 0
          %1258 = vmatpush2.bf16.msra.mxu0 %v1206
          %1259 = vmatprep.subr.bf16.mxu0 0
          %1260 = vmatpush2.bf16.msra.mxu0 %v1205
          %1261 = vmatprep.mubr.bf16.mxu0 %v1094
          %1262 = vmatmul.mubr.bf16.gmra.mxu0 %v1093
          %v1263 = vpop.f32.mrf.mxu0
          %v1264 = vadd.f32 0.0, %v1263
          %v1265 = vpop.f32.mrf.mxu0
          %v1266 = vpop.f32.mrf.mxu0
          %v1267 = vadd.f32 0.0, %v1266
          %v1268 = vpop.f32.mrf.mxu0
          %1269 = vmatprep.mubr.bf16.mxu0 %v1096
          %1270 = vmatmul.mubr.bf16.gmra.mxu0 %v1095
          %v1271 = vpop.f32.mrf.mxu0
          %v1272 = vadd.f32 0.0, %v1271
          %v1273 = vpop.f32.mrf.mxu0
          %v1274 = vpop.f32.mrf.mxu0
          %v1275 = vadd.f32 0.0, %v1274
          %v1276 = vpop.f32.mrf.mxu0
          %1277 = vdwg.mxu0
          %v1278 = vadd.f32 %v1097, %v1264
          %v1279 = vadd.f32 %v1098, %v1267
          %v1280 = vadd.f32 %v1099, %v1272
          %v1281 = vadd.f32 %v1100, %v1275
          %1282 = vst [vmem:[#allocation3] sm:$0xff] %v1278
          %1283 = vst [vmem:[#allocation3 + $0x8] sm:$0xff] %v1279
          %1284 = vst [vmem:[#allocation3 + $0x10] sm:$0xff] %v1280
          %1285 = vst [vmem:[#allocation3 + $0x18] sm:$0xff] %v1281
        $region56: #{dil_conv_forward.1} parent=39 // pred_fallthru
          _
        %p1286 = scmp.eq.s32.totalorder %s24, 3
        // Predicated region
        $region57: #{dil_conv_forward.1} parent=39 // pred_check
          %p1287 = pneg %p1286
        $region58: #{dil_conv_forward.1} parent=39 // pred_check_branch
          %1289 = sbr.rel (%p1287) target = $region60
        $region59: #{dil_conv_forward.1} parent=39 // pred_region
          %v1290 = vld [vmem:[%s278] sm:$0xff]
          %v1291 = vld [vmem:[%s278 + $0x8] sm:$0xff]
          %v1292 = vld [vmem:[%s278 + $0x10] sm:$0xff]
          %v1293 = vld [vmem:[%s278 + $0x18] sm:$0xff]
          %vm1294 = vcmp.ge.s32.totalorder %v489, 8
          %vm1295 = vcmp.ge.s32.totalorder %v490, 8
          %v1296 = vsel %vm1294, 1, 0
          %v1297 = vsel %vm1295, 1, 0
          %vm1298 = vcmp.eq.s32.totalorder %v1296, 1
          %vm1299 = vcmp.eq.s32.totalorder %v1297, 1
          %v1300 = vsel %vm1298, %v494, 0.0
          %v1301 = vsel %vm1299, %v491, 0.0
          %v1302 = vsel %vm1298, %v492, 0.0
          %v1303 = vsel %vm1299, %v493, 0.0
          %vm1304 = vcmp.lt.s32.totalorder %v489, 8
          %vm1305 = vcmp.lt.s32.totalorder %v490, 8
          %v1306 = vsel %vm1304, 1, 0
          %v1307 = vsel %vm1305, 1, 0
          %vm1308 = vcmp.eq.s32.totalorder %v1306, 1
          %vm1309 = vcmp.eq.s32.totalorder %v1307, 1
          %v1310 = vsel %vm1308, %v492, 0.0
          %v1311 = vsel %vm1309, %v493, 0.0
          %v1312 = vsel %vm1308, %v494, 0.0
          %v1313 = vsel %vm1309, %v491, 0.0
          %1315 = vset.pattern.permute.xlu0 3
          %1316 = vperm.xlu0 %1315, %v1290
          %v1317 = vpop.permute.xlu0 %1316
          %1320 = vset.pattern.permute.xlu0 3
          %1321 = vperm.xlu0 %1320, %v1291
          %v1322 = vpop.permute.xlu0 %1321
          %1325 = vset.pattern.permute.xlu0 3
          %1326 = vperm.xlu0 %1325, %v1292
          %v1327 = vpop.permute.xlu0 %1326
          %1330 = vset.pattern.permute.xlu0 3
          %1331 = vperm.xlu0 %1330, %v1293
          %v1332 = vpop.permute.xlu0 %1331
          %v1334 = vmul.f32 %v1300, %v1317
          %v1335 = vmul.f32 %v1301, %v1322
          %v1336 = vmul.f32 %v1302, %v1327
          %v1337 = vmul.f32 %v1303, %v1332
          %v1338 = vmul.f32 %v1310, %v1317
          %v1339 = vmul.f32 %v1311, %v1322
          %v1340 = vmul.f32 %v1312, %v1327
          %v1341 = vmul.f32 %v1313, %v1332
          %v1342 = vpack.c.bf16 %v1335, %v1334
          %v1343 = vpack.c.bf16 %v1339, %v1338
          %v1344 = vpack.c.bf16 %v1337, %v1336
          %v1345 = vpack.c.bf16 %v1341, %v1340
          %v1346 = vld [vmem:[#allocation3] sm:$0xff]
          %v1347 = vld [vmem:[#allocation3 + $0x8] sm:$0xff]
          %v1348 = vld [vmem:[#allocation3 + $0x10] sm:$0xff]
          %v1349 = vld [vmem:[#allocation3 + $0x18] sm:$0xff]
          %v1350 = vld [vmem:[%s284] sm:$0xf]
          %v1351 = vld [vmem:[%s284 + $0x4] sm:$0xf]
          %v1352 = vld [vmem:[%s284 + $0x8] sm:$0xf]
          %v1353 = vld [vmem:[%s284 + $0xc] sm:$0xf]
          %v1354 = vld [vmem:[%s284 + $0x10] sm:$0xf]
          %v1355 = vld [vmem:[%s284 + $0x14] sm:$0xf]
          %v1356 = vld [vmem:[%s284 + $0x18] sm:$0xf]
          %v1357 = vld [vmem:[%s284 + $0x1c] sm:$0xf]
          %v1358 = vld [vmem:[%s284 + $0x20] sm:$0xf]
          %v1359 = vld [vmem:[%s284 + $0x24] sm:$0xf]
          %v1360 = vld [vmem:[%s284 + $0x28] sm:$0xf]
          %v1361 = vld [vmem:[%s284 + $0x2c] sm:$0xf]
          %v1362 = vld [vmem:[%s284 + $0x30] sm:$0xf]
          %v1363 = vld [vmem:[%s284 + $0x34] sm:$0xf]
          %v1364 = vld [vmem:[%s284 + $0x38] sm:$0xf]
          %v1365 = vld [vmem:[%s284 + $0x3c] sm:$0xf]
          %v1366 = vld [vmem:[%s284 + $0x40] sm:$0xf]
          %v1367 = vld [vmem:[%s284 + $0x44] sm:$0xf]
          %v1368 = vld [vmem:[%s284 + $0x48] sm:$0xf]
          %v1369 = vld [vmem:[%s284 + $0x4c] sm:$0xf]
          %v1370 = vld [vmem:[%s284 + $0x50] sm:$0xf]
          %v1371 = vld [vmem:[%s284 + $0x54] sm:$0xf]
          %v1372 = vld [vmem:[%s284 + $0x58] sm:$0xf]
          %v1373 = vld [vmem:[%s284 + $0x5c] sm:$0xf]
          %v1374 = vld [vmem:[%s284 + $0x60] sm:$0xf]
          %v1375 = vld [vmem:[%s284 + $0x64] sm:$0xf]
          %v1376 = vld [vmem:[%s284 + $0x68] sm:$0xf]
          %v1377 = vld [vmem:[%s284 + $0x6c] sm:$0xf]
          %v1378 = vld [vmem:[%s284 + $0x70] sm:$0xf]
          %v1379 = vld [vmem:[%s284 + $0x74] sm:$0xf]
          %v1380 = vld [vmem:[%s284 + $0x78] sm:$0xf]
          %v1381 = vld [vmem:[%s284 + $0x7c] sm:$0xf]
          %v1414 = vunpack.c.l.b16 %v1350
          %v1415 = vunpack.c.l.b16 %v1351
          %v1416 = vunpack.c.l.b16 %v1352
          %v1417 = vunpack.c.l.b16 %v1353
          %v1418 = vunpack.c.l.b16 %v1354
          %v1419 = vunpack.c.l.b16 %v1355
          %v1420 = vunpack.c.l.b16 %v1356
          %v1421 = vunpack.c.l.b16 %v1357
          %v1422 = vunpack.c.l.b16 %v1358
          %v1423 = vunpack.c.l.b16 %v1359
          %v1424 = vunpack.c.l.b16 %v1360
          %v1425 = vunpack.c.l.b16 %v1361
          %v1426 = vunpack.c.l.b16 %v1362
          %v1427 = vunpack.c.l.b16 %v1363
          %v1428 = vunpack.c.l.b16 %v1364
          %v1429 = vunpack.c.l.b16 %v1365
          %v1430 = vunpack.c.l.b16 %v1366
          %v1431 = vunpack.c.l.b16 %v1367
          %v1432 = vunpack.c.l.b16 %v1368
          %v1433 = vunpack.c.l.b16 %v1369
          %v1434 = vunpack.c.l.b16 %v1370
          %v1435 = vunpack.c.l.b16 %v1371
          %v1436 = vunpack.c.l.b16 %v1372
          %v1437 = vunpack.c.l.b16 %v1373
          %v1438 = vunpack.c.l.b16 %v1374
          %v1439 = vunpack.c.l.b16 %v1375
          %v1440 = vunpack.c.l.b16 %v1376
          %v1441 = vunpack.c.l.b16 %v1377
          %v1442 = vunpack.c.l.b16 %v1378
          %v1443 = vunpack.c.l.b16 %v1379
          %v1444 = vunpack.c.l.b16 %v1380
          %v1445 = vunpack.c.l.b16 %v1381
          %v1446 = vpack.c.b16 %v1415, %v1414
          %v1447 = vpack.c.b16 %v1417, %v1416
          %v1448 = vpack.c.b16 %v1419, %v1418
          %v1449 = vpack.c.b16 %v1421, %v1420
          %v1450 = vpack.c.b16 %v1423, %v1422
          %v1451 = vpack.c.b16 %v1425, %v1424
          %v1452 = vpack.c.b16 %v1427, %v1426
          %v1453 = vpack.c.b16 %v1429, %v1428
          %v1454 = vpack.c.b16 %v1431, %v1430
          %v1455 = vpack.c.b16 %v1433, %v1432
          %v1456 = vpack.c.b16 %v1435, %v1434
          %v1457 = vpack.c.b16 %v1437, %v1436
          %v1458 = vpack.c.b16 %v1439, %v1438
          %v1459 = vpack.c.b16 %v1441, %v1440
          %v1460 = vpack.c.b16 %v1443, %v1442
          %v1461 = vpack.c.b16 %v1445, %v1444
          %1478 = vmatprep.subr.bf16.mxu0 0
          %1479 = vmatpush1.bf16.msra.mxu0 %v1453
          %1480 = vmatprep.subr.bf16.mxu0 0
          %1481 = vmatpush1.bf16.msra.mxu0 %v1452
          %1482 = vmatprep.subr.bf16.mxu0 0
          %1483 = vmatpush1.bf16.msra.mxu0 %v1451
          %1484 = vmatprep.subr.bf16.mxu0 0
          %1485 = vmatpush1.bf16.msra.mxu0 %v1450
          %1486 = vmatprep.subr.bf16.mxu0 0
          %1487 = vmatpush1.bf16.msra.mxu0 %v1449
          %1488 = vmatprep.subr.bf16.mxu0 0
          %1489 = vmatpush1.bf16.msra.mxu0 %v1448
          %1490 = vmatprep.subr.bf16.mxu0 0
          %1491 = vmatpush1.bf16.msra.mxu0 %v1447
          %1492 = vmatprep.subr.bf16.mxu0 0
          %1493 = vmatpush1.bf16.msra.mxu0 %v1446
          %1494 = vmatprep.subr.bf16.mxu0 0
          %1495 = vmatpush2.bf16.msra.mxu0 %v1461
          %1496 = vmatprep.subr.bf16.mxu0 0
          %1497 = vmatpush2.bf16.msra.mxu0 %v1460
          %1498 = vmatprep.subr.bf16.mxu0 0
          %1499 = vmatpush2.bf16.msra.mxu0 %v1459
          %1500 = vmatprep.subr.bf16.mxu0 0
          %1501 = vmatpush2.bf16.msra.mxu0 %v1458
          %1502 = vmatprep.subr.bf16.mxu0 0
          %1503 = vmatpush2.bf16.msra.mxu0 %v1457
          %1504 = vmatprep.subr.bf16.mxu0 0
          %1505 = vmatpush2.bf16.msra.mxu0 %v1456
          %1506 = vmatprep.subr.bf16.mxu0 0
          %1507 = vmatpush2.bf16.msra.mxu0 %v1455
          %1508 = vmatprep.subr.bf16.mxu0 0
          %1509 = vmatpush2.bf16.msra.mxu0 %v1454
          %1510 = vmatprep.mubr.bf16.mxu0 %v1343
          %1511 = vmatmul.mubr.bf16.gmra.mxu0 %v1342
          %v1512 = vpop.f32.mrf.mxu0
          %v1513 = vadd.f32 0.0, %v1512
          %v1514 = vpop.f32.mrf.mxu0
          %v1515 = vpop.f32.mrf.mxu0
          %v1516 = vadd.f32 0.0, %v1515
          %v1517 = vpop.f32.mrf.mxu0
          %1518 = vmatprep.mubr.bf16.mxu0 %v1345
          %1519 = vmatmul.mubr.bf16.gmra.mxu0 %v1344
          %v1520 = vpop.f32.mrf.mxu0
          %v1521 = vadd.f32 0.0, %v1520
          %v1522 = vpop.f32.mrf.mxu0
          %v1523 = vpop.f32.mrf.mxu0
          %v1524 = vadd.f32 0.0, %v1523
          %v1525 = vpop.f32.mrf.mxu0
          %1526 = vdwg.mxu0
          %v1527 = vadd.f32 %v1346, %v1513
          %v1528 = vadd.f32 %v1347, %v1516
          %v1529 = vadd.f32 %v1348, %v1521
          %v1530 = vadd.f32 %v1349, %v1524
          %1531 = vst [vmem:[#allocation3] sm:$0xff] %v1527
          %1532 = vst [vmem:[#allocation3 + $0x8] sm:$0xff] %v1528
          %1533 = vst [vmem:[#allocation3 + $0x10] sm:$0xff] %v1529
          %1534 = vst [vmem:[#allocation3 + $0x18] sm:$0xff] %v1530
          %v1535 = vld [vmem:[#allocation3] sm:$0xff]
          %v1536 = vld [vmem:[#allocation3 + $0x8] sm:$0xff]
          %v1537 = vld [vmem:[#allocation3 + $0x10] sm:$0xff]
          %v1538 = vld [vmem:[#allocation3 + $0x18] sm:$0xff]
          %v1539 = vmax.f32 %v1535, 0.0
          %v1540 = vmax.f32 %v1536, 0.0
          %v1541 = vmax.f32 %v1537, 0.0
          %v1542 = vmax.f32 %v1538, 0.0
          %1543 = vadd.xlane.f32.xlu0 %v1539
          %v1544 = vpop.xlane.xlu0 %1543
          %1545 = vadd.xlane.f32.xlu0 %v1540
          %v1546 = vpop.xlane.xlu0 %1545
          %1547 = vadd.xlane.f32.xlu0 %v1541
          %v1548 = vpop.xlane.xlu0 %1547
          %1549 = vadd.xlane.f32.xlu0 %v1542
          %v1550 = vpop.xlane.xlu0 %1549
          %v1551 = vrcp.pop 128.0
          %v1552 = vmul.f32 %v1544, %v1551
          %v1553 = vmul.f32 %v1546, %v1551
          %v1554 = vmul.f32 %v1548, %v1551
          %v1555 = vmul.f32 %v1550, %v1551
          %v1556 = vsub.f32 %v1539, %v1552
          %v1557 = vsub.f32 %v1540, %v1553
          %v1558 = vsub.f32 %v1541, %v1554
          %v1559 = vsub.f32 %v1542, %v1555
          %v1560 = vmul.f32 %v1556, %v1556
          %v1561 = vmul.f32 %v1557, %v1557
          %v1562 = vmul.f32 %v1558, %v1558
          %v1563 = vmul.f32 %v1559, %v1559
          %1564 = vadd.xlane.f32.xlu0 %v1560
          %v1565 = vpop.xlane.xlu0 %1564
          %1566 = vadd.xlane.f32.xlu0 %v1561
          %v1567 = vpop.xlane.xlu0 %1566
          %1568 = vadd.xlane.f32.xlu0 %v1562
          %v1569 = vpop.xlane.xlu0 %1568
          %1570 = vadd.xlane.f32.xlu0 %v1563
          %v1571 = vpop.xlane.xlu0 %1570
          %v1572 = vmul.f32 %v1565, %v1551
          %v1573 = vmul.f32 %v1567, %v1551
          %v1574 = vmul.f32 %v1569, %v1551
          %v1575 = vmul.f32 %v1571, %v1551
          %v1576 = vadd.f32 %v1572, 1e-05
          %v1577 = vadd.f32 %v1573, 1e-05
          %v1578 = vadd.f32 %v1574, 1e-05
          %v1579 = vadd.f32 %v1575, 1e-05
          %v1580 = vrsqrt.pop %v1576
          %v1581 = vrsqrt.pop %v1577
          %v1582 = vrsqrt.pop %v1578
          %v1583 = vrsqrt.pop %v1579
          %v1584 = vmul.f32 %v1556, %v1580
          %v1585 = vmul.f32 %v1557, %v1581
          %v1586 = vmul.f32 %v1558, %v1582
          %v1587 = vmul.f32 %v1559, %v1583
          %v1588 = vlaneseq
          %v1589 = vshrl.u32 %v1588, 7
          %v1590 = vsub.s32 0, %v1589
          %v1591 = vrot.slane %v289, %v1590
          %v1592 = vmul.f32 %v1584, %v1591
          %v1593 = vmul.f32 %v1585, %v1591
          %v1594 = vmul.f32 %v1586, %v1591
          %v1595 = vmul.f32 %v1587, %v1591
          %v1596 = vlaneseq
          %v1597 = vshrl.u32 %v1596, 7
          %v1598 = vsub.s32 0, %v1597
          %v1599 = vrot.slane %v290, %v1598
          %v1600 = vadd.f32 %v1592, %v1599
          %v1601 = vadd.f32 %v1593, %v1599
          %v1602 = vadd.f32 %v1594, %v1599
          %v1603 = vadd.f32 %v1595, %v1599
          %v1604 = vadd.f32 %v1600, %v491
          %v1605 = vadd.f32 %v1601, %v492
          %v1606 = vadd.f32 %v1602, %v493
          %v1607 = vadd.f32 %v1603, %v494
          %1608 = vst [vmem:[%s265] sm:$0xff] %v1604
          %1609 = vst [vmem:[%s265 + $0x8] sm:$0xff] %v1605
          %1610 = vst [vmem:[%s265 + $0x10] sm:$0xff] %v1606
          %1611 = vst [vmem:[%s265 + $0x18] sm:$0xff] %v1607
        $region60: #{dil_conv_forward.1} parent=39 // pred_fallthru
          _
        %s1612 = sand.u32 %s159, 1
        %s1613 = scalar_lea.sflag [#allocation5], %s1612
        %s1614 = sand.u32 %s159, 1
        %s1615 = smul.addr %s1614, 32
        %s1616 = scalar_lea.vmem [#allocation4], %s1615
        // Predicated region
        $region61: #{dil_conv_forward.1} parent=39 // pred_check
          %p1617 = pneg %p169
        $region62: #{dil_conv_forward.1} parent=39 // pred_check_branch
          %1619 = sbr.rel (%p1617) target = $region64
        $region63: #{dil_conv_forward.1} parent=39 // pred_region
          %s1620 = smul.u32 2, %s23
          %s1622 = ssub.s32 512, 512
          %1623 = vsyncadd %s1613, %s1622
          %s1624 = smul.addr %s1620, 2
          %s1625 = smul.addr %s1624, 128
          %s1626 = scalar_lea.hbm %s5, %s1625
          %s1627 = sshll.u32 %s1616, 4
          %s1628 = int_to_ptr.vmem [resolvable:$true] %s1627
          %1633 = dma.vmem_to_hbm [thread:$0]  %s1628, 512, %s1626, %s1613, 128, 128, 8
        $region64: #{dil_conv_forward.1} parent=39 // pred_fallthru
          _
      $region40: #{dil_conv_forward.1} parent=5 // pred_fallthru
        _
      %p1634 = scmp.le.s32.totalorder 2, %s14
      // Predicated region
      $region65: #{dil_conv_forward.1} parent=5 // pred_check
        %p1635 = pneg %p1634
      $region66: #{dil_conv_forward.1} parent=5 // pred_check_branch
        %1637 = sbr.rel (%p1635) target = $region68
      $region67: #{dil_conv_forward.1} parent=5 // pred_region
        %s1638 = ssub.s32 %s14, 2
        // Predicated region
        $region69: #{dil_conv_forward.1} parent=67 // pred_check
          %p1639 = pneg %p175
        $region70: #{dil_conv_forward.1} parent=67 // pred_check_branch
          %1641 = sbr.rel (%p1639) target = $region72
        $region71: #{dil_conv_forward.1} parent=67 // pred_region
          %s1642 = sand.u32 %s160, 1
          %s1643 = scalar_lea.sflag [#allocation5], %s1642
          %s1644 = sand.u32 %s160, 1
          %s1645 = smul.addr %s1644, 32
          %s1646 = scalar_lea.vmem [#allocation4], %s1645
          %1647 = dma.done %s1643, 512
        $region72: #{dil_conv_forward.1} parent=67 // pred_fallthru
          _
      $region68: #{dil_conv_forward.1} parent=5 // pred_fallthru
        _
    $region6: #{dil_conv_forward.1} parent=1 // loop_footer
      %s18 = sadd.s32 1, %s14
    $region7: #{dil_conv_forward.1} parent=1 // loop_footer_branch
      %13 = sbr.rel target = $region3
    $region8: #{dil_conv_forward.1} parent=1 // loop_exit
      _
    %1648 = vsyncpa [#allocation5], 1
    %s1649 = scalar_lea.sflag [#allocation5], 1
    %1650 = vsyncpa %s1649, 1

</llo_original>
